<compile_context>
chip_gen: v7x
topology: tpu7x:2x2x1
jax: 0.10.0
libtpu: 0.0.40
codegen_flags: <defaults>
</compile_context>

<pallas_src>
import jax
import jax.numpy as jnp
from jax.experimental import pallas as pl
from jax.experimental.pallas import tpu as pltpu


# ------------------------------ Pallas kernel ------------------------------ #
def _scaleup_kernel(x_ref, v_ref, uwt_ref, b_ref, o_ref):
    """One image per grid step.

    x_ref  : (1, Cin*H, W)        f32   input image (NCHW, leading dims merged)
    v_ref  : (3, Cout*H2, Cin*H)  bf16  conv weights folded with row-upsample
    uwt_ref: (3, W, W2)           f32   col-upsample (+ horizontal shift) matrices
    b_ref  : (Cout*H2, 1)         f32   per-row bias
    o_ref  : (1, Cout*H2, W2)     f32   output image (NCHW, leading dims merged)
    """
    xs = x_ref[0].astype(jnp.bfloat16)                                   # (Cin*H, W)
    acc = None
    for dw in range(3):                                                  # unrolled
        # channel mix + row upsample (+ vertical conv tap), folded in v_ref[dw]
        y = jnp.dot(v_ref[dw], xs, preferred_element_type=jnp.float32)   # (Cout*H2, W)
        # column upsample (+ horizontal conv tap / zero padding)
        t = jnp.dot(y, uwt_ref[dw], preferred_element_type=jnp.float32)  # (Cout*H2, W2)
        acc = t if acc is None else acc + t
    # f32 epilogue: bias + ReLU on the f32 accumulator (no bf16 VPU math).
    o_ref[0] = jnp.maximum(acc + b_ref[...], 0.0).astype(o_ref.dtype)


# ------------------------------- JAX wrapper ------------------------------- #
def _bilinear_matrix(out_size, in_size):
    """(out_size, in_size) 1-D sampling matrix of bilinear align_corners=True."""
    if in_size == 1:
        return jnp.ones((out_size, 1), jnp.float32)
    pos = jnp.arange(out_size, dtype=jnp.float32) * (in_size - 1) / (out_size - 1)
    lo = jnp.clip(jnp.floor(pos).astype(jnp.int32), 0, in_size - 2)
    frac = pos - lo.astype(jnp.float32)
    rows = jnp.arange(out_size)
    m = jnp.zeros((out_size, in_size), jnp.float32)
    m = m.at[rows, lo].add(1.0 - frac)
    m = m.at[rows, lo + 1].add(frac)
    return m


def _fold_params(w_oihw, bias, H, W):
    """Fold bilinear-x2 (align_corners=True) + conv pad=1 into matmul operands."""
    Cout, Cin, KH, KW = w_oihw.shape
    assert (KH, KW) == (3, 3)
    H2, W2 = 2 * H, 2 * W

    uh = _bilinear_matrix(H2, H)                          # (H2, H)
    uw = _bilinear_matrix(W2, W)                          # (W2, W)
    uhp = jnp.pad(uh, ((1, 1), (0, 0)))                   # zero rows <=> conv pad=1
    uwp = jnp.pad(uw, ((1, 1), (0, 0)))
    uh_sh = jnp.stack([uhp[u:u + H2, :] for u in range(3)])       # (3, H2, H)
    uwt3 = jnp.stack([uwp[v:v + W2, :].T for v in range(3)])      # (3, W, W2)

    # vhuge[v, co*H2 + r2, ci*H + h] = sum_u w[co, ci, u, v] * uh_sh[u, r2, h]
    vhuge = jnp.einsum('oiuv,urh->vorih', w_oihw.astype(jnp.float32), uh_sh)
    vhuge = vhuge.reshape(3, Cout * H2, Cin * H).astype(jnp.bfloat16)

    bias_rows = jnp.repeat(bias.astype(jnp.float32), H2).reshape(Cout * H2, 1)
    return vhuge, uwt3, bias_rows


@jax.jit
def scale_up_forward(x_nchw, w_oihw, bias):
    """ScaleUp.forward: (N, Cin, H, W) -> (N, Cout, 2H, 2W), NCHW in/out."""
    N, Cin, H, W = x_nchw.shape
    Cout = w_oihw.shape[0]
    H2, W2 = 2 * H, 2 * W

    vhuge, uwt3, bias_rows = _fold_params(w_oihw, bias, H, W)
    xs = x_nchw.reshape(N, Cin * H, W)                # layout-preserving, no copy

    flops = N * 3 * 2 * (Cout * H2 * Cin * H * W + Cout * H2 * W * W2)
    bytes_accessed = (xs.size * 4 + N * Cout * H2 * W2 * 4
                      + vhuge.size * 2 + uwt3.size * 4 + bias_rows.size * 4)

    out = pl.pallas_call(
        _scaleup_kernel,
        out_shape=jax.ShapeDtypeStruct((N, Cout * H2, W2), jnp.float32),
        grid=(N,),
        in_specs=[
            pl.BlockSpec((1, Cin * H, W), lambda n: (n, 0, 0)),          # per image
            pl.BlockSpec((3, Cout * H2, Cin * H), lambda n: (0, 0, 0)),  # resident
            pl.BlockSpec((3, W, W2), lambda n: (0, 0, 0)),               # resident
            pl.BlockSpec((Cout * H2, 1), lambda n: (0, 0)),              # resident
        ],
        out_specs=pl.BlockSpec((1, Cout * H2, W2), lambda n: (n, 0, 0)),
        compiler_params=pltpu.CompilerParams(
            dimension_semantics=("parallel",),     # batch shards over v7x's 2 TCs
            vmem_limit_bytes=8 * 1024 * 1024,      # explicit; well under v7x 64 MiB
        ),
        cost_estimate=pl.CostEstimate(
            flops=flops, transcendentals=0, bytes_accessed=bytes_accessed),
    )(xs, vhuge, uwt3, bias_rows)

    return out.reshape(N, Cout, H2, W2)               # layout-preserving, no copy


def init_scaleup_params(key, in_size, out_size):
    """Kaiming-normal conv weight (fan_in = 9*in_size, gain sqrt(2)), zero bias."""
    fan_in = in_size * 3 * 3
    std = (2.0 / fan_in) ** 0.5
    w = jax.random.normal(key, (out_size, in_size, 3, 3), dtype=jnp.float32) * std
    b = jnp.zeros((out_size,), dtype=jnp.float32)
    return w, b


# --------------------------- pure-JAX reference ---------------------------- #
def _reference_scale_up(x, w, b):
    N, Cin, H, W = x.shape
    H2, W2 = 2 * H, 2 * W
    ys = jnp.arange(H2, dtype=jnp.float32) * (H - 1) / (H2 - 1)
    xs = jnp.arange(W2, dtype=jnp.float32) * (W - 1) / (W2 - 1)
    y0 = jnp.floor(ys).astype(jnp.int32)
    y1 = jnp.minimum(y0 + 1, H - 1)
    wy = ys - y0.astype(jnp.float32)
    x0 = jnp.floor(xs).astype(jnp.int32)
    x1 = jnp.minimum(x0 + 1, W - 1)
    wx = xs - x0.astype(jnp.float32)
    rows = (x[:, :, y0, :] * (1.0 - wy)[None, None, :, None]
            + x[:, :, y1, :] * wy[None, None, :, None])
    up = (rows[:, :, :, x0] * (1.0 - wx)[None, None, None, :]
          + rows[:, :, :, x1] * wx[None, None, None, :])
    out = jax.lax.conv_general_dilated(
        up, w, window_strides=(1, 1), padding=((1, 1), (1, 1)),
        dimension_numbers=('NCHW', 'OIHW', 'NCHW'),
        precision=jax.lax.Precision.HIGHEST)
    return jnp.maximum(out + b[None, :, None, None], 0.0)


if __name__ == "__main__":
    key = jax.random.PRNGKey(0)
    k_in, k_w = jax.random.split(key)

    N, Cin, H, W = 2, 4, 16, 16
    Cout = 8

    x = jax.random.normal(k_in, (N, Cin, H, W), dtype=jnp.float32)
    w, b = init_scaleup_params(k_w, Cin, Cout)

    y = scale_up_forward(x, w, b)
    jax.block_until_ready(y)

    assert y.shape == (N, Cout, 2 * H, 2 * W), y.shape
    assert bool(jnp.all(y >= 0.0)), "ReLU output must be non-negative"

    ref = _reference_scale_up(x, w, b)
    max_err = float(jnp.max(jnp.abs(y - ref)))
    # bf16 folded weights / MXU activations with f32 accumulation => small abs err.
    assert max_err < 0.15, f"max abs error vs reference too large: {max_err}"

    print("KERNEL_OK")
</pallas_src>

<mosaic_0001>
module attributes {stable_mosaic.version = 11 : i64} {
  func.func private @main(%arg0: i32) attributes {dimension_semantics = [#tpu.dimension_semantics<core_parallel>], iteration_bounds = array<i64: 2>, tpu.core_type = #tpu.core_type<sc_scalar_subcore>, window_params = []} {
    return
  }
}

module attributes {stable_mosaic.version = 11 : i64} {
  func.func private @main(%arg0: i32) attributes {dimension_semantics = [#tpu.dimension_semantics<core_parallel>], iteration_bounds = array<i64: 2>, tpu.core_type = #tpu.core_type<sc_scalar_subcore>, window_params = []} {
    return
  }
}

module attributes {stable_mosaic.version = 11 : i64} {
  func.func @_scaleup_kernel(%arg0: i32, %arg1: memref<1x64x16xf32, #tpu.memory_space<vmem>>, %arg2: memref<3x256x64xbf16, #tpu.memory_space<vmem>>, %arg3: memref<3x16x32xf32, #tpu.memory_space<vmem>>, %arg4: memref<256x1xf32, #tpu.memory_space<vmem>>, %arg5: memref<1x256x32xf32, #tpu.memory_space<vmem>>) attributes {dimension_semantics = [#tpu.dimension_semantics<parallel>], iteration_bounds = array<i64: 2>, scalar_prefetch = 0 : i64, scratch_operands = 0 : i64, tpu.core_type = #tpu.core_type<tc>, window_params = [{transform_indices = @transform_0, window_bounds = array<i64: 1, 64, 16>}, {pipeline_mode = #tpu.pipeline_mode<synchronous>, transform_indices = @transform_1, window_bounds = array<i64: 3, 256, 64>}, {pipeline_mode = #tpu.pipeline_mode<synchronous>, transform_indices = @transform_2, window_bounds = array<i64: 3, 16, 32>}, {pipeline_mode = #tpu.pipeline_mode<synchronous>, transform_indices = @transform_3, window_bounds = array<i64: 256, 1>}, {transform_indices = @transform_4, window_bounds = array<i64: 1, 256, 32>}]} {
    %c0 = arith.constant 0 : index
    %c0_0 = arith.constant 0 : index
    %c0_1 = arith.constant 0 : index
    %0 = vector.load %arg1[%c0, %c0_0, %c0_1] : memref<1x64x16xf32, #tpu.memory_space<vmem>>, vector<1x64x16xf32>
    %1 = vector.shape_cast %0 : vector<1x64x16xf32> to vector<64x16xf32>
    %2 = arith.truncf %1 : vector<64x16xf32> to vector<64x16xbf16>
    %c0_2 = arith.constant 0 : index
    %c0_3 = arith.constant 0 : index
    %c0_4 = arith.constant 0 : index
    %3 = vector.load %arg2[%c0_2, %c0_3, %c0_4] : memref<3x256x64xbf16, #tpu.memory_space<vmem>>, vector<1x256x64xbf16>
    %4 = vector.shape_cast %3 : vector<1x256x64xbf16> to vector<256x64xbf16>
    %cst = arith.constant dense<0.000000e+00> : vector<256x16xf32>
    %5 = tpu.matmul %4, %2, %cst {dimension_numbers = #tpu.dot_dimension_numbers<[1], [0], [0], [1], [0, 0, 1, 1], [], []>} : vector<256x64xbf16>, vector<64x16xbf16>, vector<256x16xf32> -> vector<256x16xf32>
    %c0_5 = arith.constant 0 : index
    %c0_6 = arith.constant 0 : index
    %c0_7 = arith.constant 0 : index
    %6 = vector.load %arg3[%c0_5, %c0_6, %c0_7] : memref<3x16x32xf32, #tpu.memory_space<vmem>>, vector<1x16x32xf32>
    %7 = vector.shape_cast %6 : vector<1x16x32xf32> to vector<16x32xf32>
    %cst_8 = arith.constant dense<0.000000e+00> : vector<256x32xf32>
    %8 = tpu.matmul %5, %7, %cst_8 {dimension_numbers = #tpu.dot_dimension_numbers<[1], [0], [0], [1], [0, 0, 1, 1], [], []>} : vector<256x16xf32>, vector<16x32xf32>, vector<256x32xf32> -> vector<256x32xf32>
    %c1 = arith.constant 1 : index
    %c0_9 = arith.constant 0 : index
    %c0_10 = arith.constant 0 : index
    %9 = vector.load %arg2[%c1, %c0_9, %c0_10] : memref<3x256x64xbf16, #tpu.memory_space<vmem>>, vector<1x256x64xbf16>
    %10 = vector.shape_cast %9 : vector<1x256x64xbf16> to vector<256x64xbf16>
    %cst_11 = arith.constant dense<0.000000e+00> : vector<256x16xf32>
    %11 = tpu.matmul %10, %2, %cst_11 {dimension_numbers = #tpu.dot_dimension_numbers<[1], [0], [0], [1], [0, 0, 1, 1], [], []>} : vector<256x64xbf16>, vector<64x16xbf16>, vector<256x16xf32> -> vector<256x16xf32>
    %c1_12 = arith.constant 1 : index
    %c0_13 = arith.constant 0 : index
    %c0_14 = arith.constant 0 : index
    %12 = vector.load %arg3[%c1_12, %c0_13, %c0_14] : memref<3x16x32xf32, #tpu.memory_space<vmem>>, vector<1x16x32xf32>
    %13 = vector.shape_cast %12 : vector<1x16x32xf32> to vector<16x32xf32>
    %cst_15 = arith.constant dense<0.000000e+00> : vector<256x32xf32>
    %14 = tpu.matmul %11, %13, %cst_15 {dimension_numbers = #tpu.dot_dimension_numbers<[1], [0], [0], [1], [0, 0, 1, 1], [], []>} : vector<256x16xf32>, vector<16x32xf32>, vector<256x32xf32> -> vector<256x32xf32>
    %15 = arith.addf %8, %14 : vector<256x32xf32>
    %c2 = arith.constant 2 : index
    %c0_16 = arith.constant 0 : index
    %c0_17 = arith.constant 0 : index
    %16 = vector.load %arg2[%c2, %c0_16, %c0_17] : memref<3x256x64xbf16, #tpu.memory_space<vmem>>, vector<1x256x64xbf16>
    %17 = vector.shape_cast %16 : vector<1x256x64xbf16> to vector<256x64xbf16>
    %cst_18 = arith.constant dense<0.000000e+00> : vector<256x16xf32>
    %18 = tpu.matmul %17, %2, %cst_18 {dimension_numbers = #tpu.dot_dimension_numbers<[1], [0], [0], [1], [0, 0, 1, 1], [], []>} : vector<256x64xbf16>, vector<64x16xbf16>, vector<256x16xf32> -> vector<256x16xf32>
    %c2_19 = arith.constant 2 : index
    %c0_20 = arith.constant 0 : index
    %c0_21 = arith.constant 0 : index
    %19 = vector.load %arg3[%c2_19, %c0_20, %c0_21] : memref<3x16x32xf32, #tpu.memory_space<vmem>>, vector<1x16x32xf32>
    %20 = vector.shape_cast %19 : vector<1x16x32xf32> to vector<16x32xf32>
    %cst_22 = arith.constant dense<0.000000e+00> : vector<256x32xf32>
    %21 = tpu.matmul %18, %20, %cst_22 {dimension_numbers = #tpu.dot_dimension_numbers<[1], [0], [0], [1], [0, 0, 1, 1], [], []>} : vector<256x16xf32>, vector<16x32xf32>, vector<256x32xf32> -> vector<256x32xf32>
    %22 = arith.addf %15, %21 : vector<256x32xf32>
    %c0_23 = arith.constant 0 : index
    %c0_24 = arith.constant 0 : index
    %23 = vector.load %arg4[%c0_23, %c0_24] : memref<256x1xf32, #tpu.memory_space<vmem>>, vector<256x1xf32>
    %24 = vector.broadcast %23 : vector<256x1xf32> to vector<256x32xf32>
    %25 = arith.addf %22, %24 : vector<256x32xf32>
    %cst_25 = arith.constant 0.000000e+00 : f32
    %26 = vector.broadcast %cst_25 : f32 to vector<256x32xf32>
    %27 = arith.maximumf %25, %26 : vector<256x32xf32>
    %c0_26 = arith.constant 0 : index
    %c0_27 = arith.constant 0 : index
    %c0_28 = arith.constant 0 : index
    %28 = vector.load %arg5[%c0_26, %c0_27, %c0_28] : memref<1x256x32xf32, #tpu.memory_space<vmem>>, vector<1x256x32xf32>
    %29 = vector.shape_cast %28 : vector<1x256x32xf32> to vector<256x32xf32>
    %30 = vector.shape_cast %27 : vector<256x32xf32> to vector<1x256x32xf32>
    tpu.vector_store %arg5[%c0_26, %c0_27, %c0_28], %30 {strides = array<i32>} : memref<1x256x32xf32, #tpu.memory_space<vmem>>, vector<1x256x32xf32>,
    return
  }
  func.func @transform_0(%arg0: i32) -> (i32, i32, i32) {
    %c0_i32 = arith.constant 0 : i32
    %c0_i32_0 = arith.constant 0 : i32
    %c0_i32_1 = arith.constant 0 : i32
    return %arg0, %c0_i32, %c0_i32_0 : i32, i32, i32
  }
  func.func @transform_1(%arg0: i32) -> (i32, i32, i32) {
    %c0_i32 = arith.constant 0 : i32
    %c0_i32_0 = arith.constant 0 : i32
    %c0_i32_1 = arith.constant 0 : i32
    %c0_i32_2 = arith.constant 0 : i32
    return %c0_i32, %c0_i32_0, %c0_i32_1 : i32, i32, i32
  }
  func.func @transform_2(%arg0: i32) -> (i32, i32, i32) {
    %c0_i32 = arith.constant 0 : i32
    %c0_i32_0 = arith.constant 0 : i32
    %c0_i32_1 = arith.constant 0 : i32
    %c0_i32_2 = arith.constant 0 : i32
    return %c0_i32, %c0_i32_0, %c0_i32_1 : i32, i32, i32
  }
  func.func @transform_3(%arg0: i32) -> (i32, i32) {
    %c0_i32 = arith.constant 0 : i32
    %c0_i32_0 = arith.constant 0 : i32
    %c0_i32_1 = arith.constant 0 : i32
    return %c0_i32, %c0_i32_0 : i32, i32
  }
  func.func @transform_4(%arg0: i32) -> (i32, i32, i32) {
    %c0_i32 = arith.constant 0 : i32
    %c0_i32_0 = arith.constant 0 : i32
    %c0_i32_1 = arith.constant 0 : i32
    return %arg0, %c0_i32, %c0_i32_0 : i32, i32, i32
  }
}

</mosaic_0001>

<llo_original>
// kernel: scale_up_forward.1
$region0: #{scale_up_forward.1}
  #allocation0 [shape = 'u32[]', space=smem, size = 0x4, offset = 0x4, fixed_abs, tag = 'smem constant byte address 0x4 - core index']
  #allocation1 [shape = 'u32[144,128]{1,0:T(1,128)}', space=vmem, size = 0x12000, scoped, tag = 'internal scratch']
  %s0 = inlined_call_operand.vmem [shape: f32[2,64,16], index: 0, kind: input, shape index: {}]
  %s1 = inlined_call_operand.vmem [shape: bf16[3,256,64], index: 1, kind: input, shape index: {}]
  %s2 = inlined_call_operand.vmem [shape: f32[3,16,32], index: 2, kind: input, shape index: {}]
  %s3 = inlined_call_operand.vmem [shape: f32[256,1], index: 3, kind: input, shape index: {}]
  %s4 = inlined_call_operand.hbm [shape: f32[2,256,32], index: 4, kind: output, shape index: {}]
  %s5 = sld [smem:[#allocation0]]
  $region49: #{scale_up_forward.1} parent=0
    _
  %s7 = ssub.s32 1, %s5
  %s8 = scalar_select 0, %s7, %s5
  $region1: #{scale_up_forward.1} parent=0
    #allocation2 [shape = 'u8[262144]{0}', space=vmem, size = 0x40000, scoped, tag = 'output window, operand 0']
    #allocation3 [shape = 's32[2]{0}', space=sflag, size = 0x8, scoped, tag = 'scoped memory for scale_up_forward.1']
    %9 = vsyncpa [#allocation3], 0
    %s10 = scalar_lea.sflag [#allocation3], 1
    %11 = vsyncpa %s10, 0
    loop: start=0, step=1, limit=4
    $region2: #{scale_up_forward.1} parent=1 // loop_pre_header
      _
    $region3: #{scale_up_forward.1} parent=1 // loop_header
      %s13 = sphi 0, %s17
      %p14 = scmp.ge.s32.totalorder %s13, 4
      %s23 = sphi 0, %s25
      %s26 = sphi 0, %s23
      %s27 = sphi 0, %s26
      %s43 = sphi 0, %s27
      %s47 = sphi 0, %s47
      %s49 = sphi 0, %s47
      %s50 = sphi 0, %s49
      %s64 = sphi 0, %s50
      %s68 = sphi 0, %s68
      %s70 = sphi 0, %s68
      %s71 = sphi 0, %s70
      %s85 = sphi 0, %s71
      %s89 = sphi 0, %s89
      %s91 = sphi 0, %s89
      %s92 = sphi 0, %s91
      %s106 = sphi 0, %s92
      %s112 = sphi 0, %s114
      %s115 = sphi 0, %s112
      %s116 = sphi 0, %s115
      %s132 = sphi 0, %s116
    $region4: #{scale_up_forward.1} parent=1 // loop_header_branch
      %16 = sbr.rel (%p14) target = $region8
    $region5: #{scale_up_forward.1} parent=1 // loop_body
      %s18 = ssub.s32 %s13, 1
      %s19 = ssub.s32 %s13, 2
      %s20 = sadd.s32 %s13, 1
      %s21 = ssub.s32 %s13, %s20
      %p22 = scmp.eq.s32.totalorder %s21, 0
      %s24 = sadd.s32 %s23, 1
      %s25 = scalar_select %p22, %s23, %s24
      %p28 = pneg %p22
      %p29 = scmp.eq.s32.totalorder %s13, 1
      %p30 = por %p28, %p29
      %p31 = scmp.ne.s32.totalorder %s23, %s26
      %p32 = scmp.eq.s32.totalorder %s13, 0
      %p33 = por %p31, %p32
      %p34 = scmp.ne.s32.totalorder %s23, %s26
      %p35 = scmp.eq.s32.totalorder %s18, 1
      %p36 = por %p34, %p35
      %p37 = scmp.ne.s32.totalorder %s26, %s27
      %p38 = scmp.eq.s32.totalorder %s18, 0
      %p39 = por %p37, %p38
      %p40 = scmp.ne.s32.totalorder %s26, %s27
      %p41 = scmp.eq.s32.totalorder %s19, 1
      %p42 = por %p40, %p41
      %p44 = scmp.ne.s32.totalorder %s27, %s43
      %p45 = scmp.eq.s32.totalorder %s19, 0
      %p46 = por %p44, %p45
      %s48 = sadd.s32 %s47, 1
      %p51 = scmp.eq.s32.totalorder %s13, 1
      %p52 = scmp.ne.s32.totalorder %s47, %s49
      %p53 = scmp.eq.s32.totalorder %s13, 0
      %p54 = por %p52, %p53
      %p55 = scmp.ne.s32.totalorder %s47, %s49
      %p56 = scmp.eq.s32.totalorder %s18, 1
      %p57 = por %p55, %p56
      %p58 = scmp.ne.s32.totalorder %s49, %s50
      %p59 = scmp.eq.s32.totalorder %s18, 0
      %p60 = por %p58, %p59
      %p61 = scmp.ne.s32.totalorder %s49, %s50
      %p62 = scmp.eq.s32.totalorder %s19, 1
      %p63 = por %p61, %p62
      %p65 = scmp.ne.s32.totalorder %s50, %s64
      %p66 = scmp.eq.s32.totalorder %s19, 0
      %p67 = por %p65, %p66
      %s69 = sadd.s32 %s68, 1
      %p72 = scmp.eq.s32.totalorder %s13, 1
      %p73 = scmp.ne.s32.totalorder %s68, %s70
      %p74 = scmp.eq.s32.totalorder %s13, 0
      %p75 = por %p73, %p74
      %p76 = scmp.ne.s32.totalorder %s68, %s70
      %p77 = scmp.eq.s32.totalorder %s18, 1
      %p78 = por %p76, %p77
      %p79 = scmp.ne.s32.totalorder %s70, %s71
      %p80 = scmp.eq.s32.totalorder %s18, 0
      %p81 = por %p79, %p80
      %p82 = scmp.ne.s32.totalorder %s70, %s71
      %p83 = scmp.eq.s32.totalorder %s19, 1
      %p84 = por %p82, %p83
      %p86 = scmp.ne.s32.totalorder %s71, %s85
      %p87 = scmp.eq.s32.totalorder %s19, 0
      %p88 = por %p86, %p87
      %s90 = sadd.s32 %s89, 1
      %p93 = scmp.eq.s32.totalorder %s13, 1
      %p94 = scmp.ne.s32.totalorder %s89, %s91
      %p95 = scmp.eq.s32.totalorder %s13, 0
      %p96 = por %p94, %p95
      %p97 = scmp.ne.s32.totalorder %s89, %s91
      %p98 = scmp.eq.s32.totalorder %s18, 1
      %p99 = por %p97, %p98
      %p100 = scmp.ne.s32.totalorder %s91, %s92
      %p101 = scmp.eq.s32.totalorder %s18, 0
      %p102 = por %p100, %p101
      %p103 = scmp.ne.s32.totalorder %s91, %s92
      %p104 = scmp.eq.s32.totalorder %s19, 1
      %p105 = por %p103, %p104
      %p107 = scmp.ne.s32.totalorder %s92, %s106
      %p108 = scmp.eq.s32.totalorder %s19, 0
      %p109 = por %p107, %p108
      %s110 = ssub.s32 %s13, %s20
      %p111 = scmp.eq.s32.totalorder %s110, 0
      %s113 = sadd.s32 %s112, 1
      %s114 = scalar_select %p111, %s112, %s113
      %p117 = pneg %p111
      %p118 = scmp.eq.s32.totalorder %s13, 1
      %p119 = por %p117, %p118
      %p120 = scmp.ne.s32.totalorder %s112, %s115
      %p121 = scmp.eq.s32.totalorder %s13, 0
      %p122 = por %p120, %p121
      %p123 = scmp.ne.s32.totalorder %s112, %s115
      %p124 = scmp.eq.s32.totalorder %s18, 1
      %p125 = por %p123, %p124
      %p126 = scmp.ne.s32.totalorder %s115, %s116
      %p127 = scmp.eq.s32.totalorder %s18, 0
      %p128 = por %p126, %p127
      %p129 = scmp.ne.s32.totalorder %s115, %s116
      %p130 = scmp.eq.s32.totalorder %s19, 1
      %p131 = por %p129, %p130
      %p133 = scmp.ne.s32.totalorder %s116, %s132
      %p134 = scmp.eq.s32.totalorder %s19, 0
      %p135 = por %p133, %p134
      %p136 = scmp.le.s32.totalorder 1, %s13
      %p137 = scmp.lt.s32.totalorder %s13, 3
      %p138 = pnand %p136, %p137
      %p139 = pneg %p138
      // Predicated region
      $region9: #{scale_up_forward.1} parent=5 // pred_check
        _
      $region10: #{scale_up_forward.1} parent=5 // pred_check_branch
        %141 = sbr.rel (%p138) target = $region12
      $region11: #{scale_up_forward.1} parent=5 // pred_region
        %s142 = ssub.s32 %s13, 1
        // Predicated region
        $region13: #{scale_up_forward.1} parent=11 // pred_check
          %p143 = pneg %p60
        $region14: #{scale_up_forward.1} parent=11 // pred_check_branch
          %145 = sbr.rel (%p143) target = $region16
        $region15: #{scale_up_forward.1} parent=11 // pred_region
          _
        $region16: #{scale_up_forward.1} parent=11 // pred_fallthru
          _
        // Predicated region
        $region17: #{scale_up_forward.1} parent=11 // pred_check
          %p146 = pneg %p81
        $region18: #{scale_up_forward.1} parent=11 // pred_check_branch
          %148 = sbr.rel (%p146) target = $region20
        $region19: #{scale_up_forward.1} parent=11 // pred_region
          _
        $region20: #{scale_up_forward.1} parent=11 // pred_fallthru
          _
        // Predicated region
        $region21: #{scale_up_forward.1} parent=11 // pred_check
          %p149 = pneg %p102
        $region22: #{scale_up_forward.1} parent=11 // pred_check_branch
          %151 = sbr.rel (%p149) target = $region24
        $region23: #{scale_up_forward.1} parent=11 // pred_region
          _
        $region24: #{scale_up_forward.1} parent=11 // pred_fallthru
          _
      $region12: #{scale_up_forward.1} parent=5 // pred_fallthru
        _
      %p152 = scmp.lt.s32.totalorder %s13, 2
      // Predicated region
      $region25: #{scale_up_forward.1} parent=5 // pred_check
        %p153 = pneg %p152
      $region26: #{scale_up_forward.1} parent=5 // pred_check_branch
        %155 = sbr.rel (%p153) target = $region28
      $region27: #{scale_up_forward.1} parent=5 // pred_region
        // Predicated region
        $region29: #{scale_up_forward.1} parent=27 // pred_check
          %p156 = pneg %p33
        $region30: #{scale_up_forward.1} parent=27 // pred_check_branch
          %158 = sbr.rel (%p156) target = $region32
        $region31: #{scale_up_forward.1} parent=27 // pred_region
          %p159 = scmp.lt.s32.totalorder %s13, 1
          %s160 = scalar_select %p159, %s13, 1
          %s161 = smul.addr %s160, 8
          %s162 = smul.addr %s161, 8
          %s163 = scalar_lea.vmem %s0, %s162
        $region32: #{scale_up_forward.1} parent=27 // pred_fallthru
          _
      $region28: #{scale_up_forward.1} parent=5 // pred_fallthru
        _
      %p164 = scmp.le.s32.totalorder 1, %s13
      %p165 = scmp.lt.s32.totalorder %s13, 3
      %p166 = pnand %p164, %p165
      %p167 = pneg %p166
      // Predicated region
      $region33: #{scale_up_forward.1} parent=5 // pred_check
        _
      $region34: #{scale_up_forward.1} parent=5 // pred_check_branch
        %169 = sbr.rel (%p166) target = $region36
      $region35: #{scale_up_forward.1} parent=5 // pred_region
        %s170 = ssub.s32 %s13, 1
        %p171 = scmp.lt.s32.totalorder %s18, 1
        %s172 = scalar_select %p171, %s18, 1
        %s173 = smul.addr %s172, 8
        %s174 = smul.addr %s173, 8
        %s175 = scalar_lea.vmem %s0, %s174
        %p176 = pneg %p39
        %p177 = pneg %p36
        %p178 = pneg %p60
        %p179 = pneg %p57
        %p180 = pneg %p81
        %p181 = pneg %p78
        %p182 = pneg %p102
        %p183 = pneg %p99
        %p184 = pneg %p128
        %p185 = pneg %p125
        %s186 = sand.u32 %s115, 1
        %s187 = scalar_lea.sflag [#allocation3], %s186
        %s188 = sand.u32 %s115, 1
        %s189 = smul.addr %s188, 256
        %s190 = scalar_lea.vmem [#allocation2], %s189
        %p191 = scmp.lt.s32.totalorder %s18, 1
        %s192 = scalar_select %p191, %s18, 1
        %s193 = smul.addr %s192, 8
        %s194 = smul.addr %s193, 8
        %s195 = scalar_lea.vmem %s0, %s194
        %v197 = vld [vmem:[%s195] sm:$0xff]
        %v198 = vld [vmem:[%s195 + $0x8] sm:$0xff]
        %v199 = vld [vmem:[%s195 + $0x10] sm:$0xff]
        %v200 = vld [vmem:[%s195 + $0x18] sm:$0xff]
        %v201 = vld [vmem:[%s195 + $0x20] sm:$0xff]
        %v202 = vld [vmem:[%s195 + $0x28] sm:$0xff]
        %v203 = vld [vmem:[%s195 + $0x30] sm:$0xff]
        %v204 = vld [vmem:[%s195 + $0x38] sm:$0xff]
        %v205 = vpack.c.bf16 %v198, %v197
        %v206 = vpack.c.bf16 %v200, %v199
        %v207 = vpack.c.bf16 %v202, %v201
        %v208 = vpack.c.bf16 %v204, %v203
        %v209 = vld [vmem:[%s1] sm:$0xf]
        %v210 = vld [vmem:[%s1 + $0x4] sm:$0xf]
        %v211 = vld [vmem:[%s1 + $0x8] sm:$0xf]
        %v212 = vld [vmem:[%s1 + $0xc] sm:$0xf]
        %v213 = vld [vmem:[%s1 + $0x10] sm:$0xf]
        %v214 = vld [vmem:[%s1 + $0x14] sm:$0xf]
        %v215 = vld [vmem:[%s1 + $0x18] sm:$0xf]
        %v216 = vld [vmem:[%s1 + $0x1c] sm:$0xf]
        %v217 = vld [vmem:[%s1 + $0x20] sm:$0xf]
        %v218 = vld [vmem:[%s1 + $0x24] sm:$0xf]
        %v219 = vld [vmem:[%s1 + $0x28] sm:$0xf]
        %v220 = vld [vmem:[%s1 + $0x2c] sm:$0xf]
        %v221 = vld [vmem:[%s1 + $0x30] sm:$0xf]
        %v222 = vld [vmem:[%s1 + $0x34] sm:$0xf]
        %v223 = vld [vmem:[%s1 + $0x38] sm:$0xf]
        %v224 = vld [vmem:[%s1 + $0x3c] sm:$0xf]
        %v225 = vld [vmem:[%s1 + $0x40] sm:$0xf]
        %v226 = vld [vmem:[%s1 + $0x44] sm:$0xf]
        %v227 = vld [vmem:[%s1 + $0x48] sm:$0xf]
        %v228 = vld [vmem:[%s1 + $0x4c] sm:$0xf]
        %v229 = vld [vmem:[%s1 + $0x50] sm:$0xf]
        %v230 = vld [vmem:[%s1 + $0x54] sm:$0xf]
        %v231 = vld [vmem:[%s1 + $0x58] sm:$0xf]
        %v232 = vld [vmem:[%s1 + $0x5c] sm:$0xf]
        %v233 = vld [vmem:[%s1 + $0x60] sm:$0xf]
        %v234 = vld [vmem:[%s1 + $0x64] sm:$0xf]
        %v235 = vld [vmem:[%s1 + $0x68] sm:$0xf]
        %v236 = vld [vmem:[%s1 + $0x6c] sm:$0xf]
        %v237 = vld [vmem:[%s1 + $0x70] sm:$0xf]
        %v238 = vld [vmem:[%s1 + $0x74] sm:$0xf]
        %v239 = vld [vmem:[%s1 + $0x78] sm:$0xf]
        %v240 = vld [vmem:[%s1 + $0x7c] sm:$0xf]
        %v273 = vunpack.c.l.b16 %v209
        %v274 = vunpack.c.l.b16 %v210
        %v275 = vunpack.c.l.b16 %v211
        %v276 = vunpack.c.l.b16 %v212
        %v277 = vunpack.c.l.b16 %v213
        %v278 = vunpack.c.l.b16 %v214
        %v279 = vunpack.c.l.b16 %v215
        %v280 = vunpack.c.l.b16 %v216
        %v281 = vunpack.c.l.b16 %v217
        %v282 = vunpack.c.l.b16 %v218
        %v283 = vunpack.c.l.b16 %v219
        %v284 = vunpack.c.l.b16 %v220
        %v285 = vunpack.c.l.b16 %v221
        %v286 = vunpack.c.l.b16 %v222
        %v287 = vunpack.c.l.b16 %v223
        %v288 = vunpack.c.l.b16 %v224
        %v289 = vunpack.c.l.b16 %v225
        %v290 = vunpack.c.l.b16 %v226
        %v291 = vunpack.c.l.b16 %v227
        %v292 = vunpack.c.l.b16 %v228
        %v293 = vunpack.c.l.b16 %v229
        %v294 = vunpack.c.l.b16 %v230
        %v295 = vunpack.c.l.b16 %v231
        %v296 = vunpack.c.l.b16 %v232
        %v297 = vunpack.c.l.b16 %v233
        %v298 = vunpack.c.l.b16 %v234
        %v299 = vunpack.c.l.b16 %v235
        %v300 = vunpack.c.l.b16 %v236
        %v301 = vunpack.c.l.b16 %v237
        %v302 = vunpack.c.l.b16 %v238
        %v303 = vunpack.c.l.b16 %v239
        %v304 = vunpack.c.l.b16 %v240
        %v305 = vpack.c.b16 %v274, %v273
        %v306 = vpack.c.b16 %v276, %v275
        %v307 = vpack.c.b16 %v278, %v277
        %v308 = vpack.c.b16 %v280, %v279
        %v309 = vpack.c.b16 %v282, %v281
        %v310 = vpack.c.b16 %v284, %v283
        %v311 = vpack.c.b16 %v286, %v285
        %v312 = vpack.c.b16 %v288, %v287
        %v313 = vpack.c.b16 %v290, %v289
        %v314 = vpack.c.b16 %v292, %v291
        %v315 = vpack.c.b16 %v294, %v293
        %v316 = vpack.c.b16 %v296, %v295
        %v317 = vpack.c.b16 %v298, %v297
        %v318 = vpack.c.b16 %v300, %v299
        %v319 = vpack.c.b16 %v302, %v301
        %v320 = vpack.c.b16 %v304, %v303
        %vm321 = vcmask 523264
        %v323 = vsel %vm321, %v305, 0
        %v326 = vsel %vm321, %v306, 0
        %v329 = vsel %vm321, %v307, 0
        %v332 = vsel %vm321, %v308, 0
        %v335 = vsel %vm321, %v309, 0
        %v338 = vsel %vm321, %v310, 0
        %v341 = vsel %vm321, %v311, 0
        %v344 = vsel %vm321, %v312, 0
        %v347 = vsel %vm321, %v313, 0
        %v350 = vsel %vm321, %v314, 0
        %v353 = vsel %vm321, %v315, 0
        %v356 = vsel %vm321, %v316, 0
        %v359 = vsel %vm321, %v317, 0
        %v362 = vsel %vm321, %v318, 0
        %v365 = vsel %vm321, %v319, 0
        %v368 = vsel %vm321, %v320, 0
        %370 = vmatprep.subr.bf16.mxu0 0
        %371 = vmatpush1.bf16.msra.mxu0 %v205
        %372 = vmatprep.subr.bf16.mxu0 0
        %373 = vmatpush1.bf16.msra.mxu0 %v206
        %374 = vmatprep.subr.bf16.mxu0 0
        %375 = vmatpush1.bf16.msra.mxu0 %v207
        %376 = vmatprep.subr.bf16.mxu0 0
        %377 = vmatpush1.bf16.msra.mxu0 %v208
        %378 = vmatprep.subr.bf16.mxu0 0
        %379 = vmatpush1.bf16.msra.mxu0 0
        %380 = vmatprep.subr.bf16.mxu0 0
        %381 = vmatpush1.bf16.msra.mxu0 0
        %382 = vmatprep.subr.bf16.mxu0 0
        %383 = vmatpush1.bf16.msra.mxu0 0
        %384 = vmatprep.subr.bf16.mxu0 0
        %385 = vmatpush1.bf16.msra.mxu0 0
        %386 = vmatprep.subr.bf16.mxu0 0
        %387 = vmatpush1.bf16.msra.mxu0 0
        %388 = vmatprep.subr.bf16.mxu0 0
        %389 = vmatpush1.bf16.msra.mxu0 0
        %390 = vmatprep.subr.bf16.mxu0 0
        %391 = vmatpush1.bf16.msra.mxu0 0
        %392 = vmatprep.subr.bf16.mxu0 0
        %393 = vmatpush1.bf16.msra.mxu0 0
        %394 = vmatprep.subr.bf16.mxu0 0
        %395 = vmatpush1.bf16.msra.mxu0 0
        %396 = vmatprep.subr.bf16.mxu0 0
        %397 = vmatpush1.bf16.msra.mxu0 0
        %398 = vmatprep.subr.bf16.mxu0 0
        %399 = vmatpush1.bf16.msra.mxu0 0
        %400 = vmatprep.subr.bf16.mxu0 0
        %401 = vmatpush1.bf16.msra.mxu0 0
        %402 = vmatprep.mubr.bf16.mxu0 0
        %403 = vmatmul.mubr.bf16.gmra.mrb[0].mxu0 %v323
        %v404 = vpop.f32.mrb[0].mxu0
        %v405 = vadd.f32 0.0, %v404
        %v406 = vpop.f32.mrb[0].mxu0
        %v407 = vpop.f32.mrb[0].mxu0
        %v408 = vadd.f32 0.0, %v407
        %v409 = vpop.f32.mrb[0].mxu0
        %410 = vmatprep.mubr.bf16.mxu0 0
        %411 = vmatmul.mubr.bf16.gmra.mrb[0].mxu0 %v326
        %v412 = vpop.f32.mrb[0].mxu0
        %v413 = vadd.f32 0.0, %v412
        %v414 = vpop.f32.mrb[0].mxu0
        %v415 = vpop.f32.mrb[0].mxu0
        %v416 = vadd.f32 0.0, %v415
        %v417 = vpop.f32.mrb[0].mxu0
        %418 = vmatprep.mubr.bf16.mxu0 0
        %419 = vmatmul.mubr.bf16.gmra.mrb[0].mxu0 %v329
        %v420 = vpop.f32.mrb[0].mxu0
        %v421 = vadd.f32 0.0, %v420
        %v422 = vpop.f32.mrb[0].mxu0
        %v423 = vpop.f32.mrb[0].mxu0
        %v424 = vadd.f32 0.0, %v423
        %v425 = vpop.f32.mrb[0].mxu0
        %426 = vmatprep.mubr.bf16.mxu0 0
        %427 = vmatmul.mubr.bf16.gmra.mrb[0].mxu0 %v332
        %v428 = vpop.f32.mrb[0].mxu0
        %v429 = vadd.f32 0.0, %v428
        %v430 = vpop.f32.mrb[0].mxu0
        %v431 = vpop.f32.mrb[0].mxu0
        %v432 = vadd.f32 0.0, %v431
        %v433 = vpop.f32.mrb[0].mxu0
        %434 = vmatprep.mubr.bf16.mxu0 0
        %435 = vmatmul.mubr.bf16.gmra.mrb[0].mxu0 %v335
        %v436 = vpop.f32.mrb[0].mxu0
        %v437 = vadd.f32 0.0, %v436
        %v438 = vpop.f32.mrb[0].mxu0
        %v439 = vpop.f32.mrb[0].mxu0
        %v440 = vadd.f32 0.0, %v439
        %v441 = vpop.f32.mrb[0].mxu0
        %442 = vmatprep.mubr.bf16.mxu0 0
        %443 = vmatmul.mubr.bf16.gmra.mrb[0].mxu0 %v338
        %v444 = vpop.f32.mrb[0].mxu0
        %v445 = vadd.f32 0.0, %v444
        %v446 = vpop.f32.mrb[0].mxu0
        %v447 = vpop.f32.mrb[0].mxu0
        %v448 = vadd.f32 0.0, %v447
        %v449 = vpop.f32.mrb[0].mxu0
        %450 = vmatprep.mubr.bf16.mxu0 0
        %451 = vmatmul.mubr.bf16.gmra.mrb[0].mxu0 %v341
        %v452 = vpop.f32.mrb[0].mxu0
        %v453 = vadd.f32 0.0, %v452
        %v454 = vpop.f32.mrb[0].mxu0
        %v455 = vpop.f32.mrb[0].mxu0
        %v456 = vadd.f32 0.0, %v455
        %v457 = vpop.f32.mrb[0].mxu0
        %458 = vmatprep.mubr.bf16.mxu0 0
        %459 = vmatmul.mubr.bf16.gmra.mrb[0].mxu0 %v344
        %v460 = vpop.f32.mrb[0].mxu0
        %v461 = vadd.f32 0.0, %v460
        %v462 = vpop.f32.mrb[0].mxu0
        %v463 = vpop.f32.mrb[0].mxu0
        %v464 = vadd.f32 0.0, %v463
        %v465 = vpop.f32.mrb[0].mxu0
        %466 = vmatprep.mubr.bf16.mxu0 0
        %467 = vmatmul.mubr.bf16.gmra.mrb[0].mxu0 %v347
        %v468 = vpop.f32.mrb[0].mxu0
        %v469 = vadd.f32 0.0, %v468
        %v470 = vpop.f32.mrb[0].mxu0
        %v471 = vpop.f32.mrb[0].mxu0
        %v472 = vadd.f32 0.0, %v471
        %v473 = vpop.f32.mrb[0].mxu0
        %474 = vmatprep.mubr.bf16.mxu0 0
        %475 = vmatmul.mubr.bf16.gmra.mrb[0].mxu0 %v350
        %v476 = vpop.f32.mrb[0].mxu0
        %v477 = vadd.f32 0.0, %v476
        %v478 = vpop.f32.mrb[0].mxu0
        %v479 = vpop.f32.mrb[0].mxu0
        %v480 = vadd.f32 0.0, %v479
        %v481 = vpop.f32.mrb[0].mxu0
        %482 = vmatprep.mubr.bf16.mxu0 0
        %483 = vmatmul.mubr.bf16.gmra.mrb[0].mxu0 %v353
        %v484 = vpop.f32.mrb[0].mxu0
        %v485 = vadd.f32 0.0, %v484
        %v486 = vpop.f32.mrb[0].mxu0
        %v487 = vpop.f32.mrb[0].mxu0
        %v488 = vadd.f32 0.0, %v487
        %v489 = vpop.f32.mrb[0].mxu0
        %490 = vmatprep.mubr.bf16.mxu0 0
        %491 = vmatmul.mubr.bf16.gmra.mrb[0].mxu0 %v356
        %v492 = vpop.f32.mrb[0].mxu0
        %v493 = vadd.f32 0.0, %v492
        %v494 = vpop.f32.mrb[0].mxu0
        %v495 = vpop.f32.mrb[0].mxu0
        %v496 = vadd.f32 0.0, %v495
        %v497 = vpop.f32.mrb[0].mxu0
        %498 = vmatprep.mubr.bf16.mxu0 0
        %499 = vmatmul.mubr.bf16.gmra.mrb[0].mxu0 %v359
        %v500 = vpop.f32.mrb[0].mxu0
        %v501 = vadd.f32 0.0, %v500
        %v502 = vpop.f32.mrb[0].mxu0
        %v503 = vpop.f32.mrb[0].mxu0
        %v504 = vadd.f32 0.0, %v503
        %v505 = vpop.f32.mrb[0].mxu0
        %506 = vmatprep.mubr.bf16.mxu0 0
        %507 = vmatmul.mubr.bf16.gmra.mrb[0].mxu0 %v362
        %v508 = vpop.f32.mrb[0].mxu0
        %v509 = vadd.f32 0.0, %v508
        %v510 = vpop.f32.mrb[0].mxu0
        %v511 = vpop.f32.mrb[0].mxu0
        %v512 = vadd.f32 0.0, %v511
        %v513 = vpop.f32.mrb[0].mxu0
        %514 = vmatprep.mubr.bf16.mxu0 0
        %515 = vmatmul.mubr.bf16.gmra.mrb[0].mxu0 %v365
        %v516 = vpop.f32.mrb[0].mxu0
        %v517 = vadd.f32 0.0, %v516
        %v518 = vpop.f32.mrb[0].mxu0
        %v519 = vpop.f32.mrb[0].mxu0
        %v520 = vadd.f32 0.0, %v519
        %v521 = vpop.f32.mrb[0].mxu0
        %522 = vmatprep.mubr.bf16.mxu0 0
        %523 = vmatmul.mubr.bf16.gmra.mrb[0].mxu0 %v368
        %v524 = vpop.f32.mrb[0].mxu0
        %v525 = vadd.f32 0.0, %v524
        %v526 = vpop.f32.mrb[0].mxu0
        %v527 = vpop.f32.mrb[0].mxu0
        %v528 = vadd.f32 0.0, %v527
        %v529 = vpop.f32.mrb[0].mxu0
        %530 = vdwg.mxu0
        %v531 = vld [vmem:[%s2] sm:$0xff]
        %v532 = vld [vmem:[%s2 + $0x8] sm:$0xff]
        %s533 = scalar_lea.vmem %s1, 128
        %v534 = vld [vmem:[%s533] sm:$0xf]
        %v535 = vld [vmem:[%s533 + $0x4] sm:$0xf]
        %v536 = vld [vmem:[%s533 + $0x8] sm:$0xf]
        %v537 = vld [vmem:[%s533 + $0xc] sm:$0xf]
        %v538 = vld [vmem:[%s533 + $0x10] sm:$0xf]
        %v539 = vld [vmem:[%s533 + $0x14] sm:$0xf]
        %v540 = vld [vmem:[%s533 + $0x18] sm:$0xf]
        %v541 = vld [vmem:[%s533 + $0x1c] sm:$0xf]
        %v542 = vld [vmem:[%s533 + $0x20] sm:$0xf]
        %v543 = vld [vmem:[%s533 + $0x24] sm:$0xf]
        %v544 = vld [vmem:[%s533 + $0x28] sm:$0xf]
        %v545 = vld [vmem:[%s533 + $0x2c] sm:$0xf]
        %v546 = vld [vmem:[%s533 + $0x30] sm:$0xf]
        %v547 = vld [vmem:[%s533 + $0x34] sm:$0xf]
        %v548 = vld [vmem:[%s533 + $0x38] sm:$0xf]
        %v549 = vld [vmem:[%s533 + $0x3c] sm:$0xf]
        %v550 = vld [vmem:[%s533 + $0x40] sm:$0xf]
        %v551 = vld [vmem:[%s533 + $0x44] sm:$0xf]
        %v552 = vld [vmem:[%s533 + $0x48] sm:$0xf]
        %v553 = vld [vmem:[%s533 + $0x4c] sm:$0xf]
        %v554 = vld [vmem:[%s533 + $0x50] sm:$0xf]
        %v555 = vld [vmem:[%s533 + $0x54] sm:$0xf]
        %v556 = vld [vmem:[%s533 + $0x58] sm:$0xf]
        %v557 = vld [vmem:[%s533 + $0x5c] sm:$0xf]
        %v558 = vld [vmem:[%s533 + $0x60] sm:$0xf]
        %v559 = vld [vmem:[%s533 + $0x64] sm:$0xf]
        %v560 = vld [vmem:[%s533 + $0x68] sm:$0xf]
        %v561 = vld [vmem:[%s533 + $0x6c] sm:$0xf]
        %v562 = vld [vmem:[%s533 + $0x70] sm:$0xf]
        %v563 = vld [vmem:[%s533 + $0x74] sm:$0xf]
        %v564 = vld [vmem:[%s533 + $0x78] sm:$0xf]
        %v565 = vld [vmem:[%s533 + $0x7c] sm:$0xf]
        %v598 = vunpack.c.l.b16 %v534
        %v599 = vunpack.c.l.b16 %v535
        %v600 = vunpack.c.l.b16 %v536
        %v601 = vunpack.c.l.b16 %v537
        %v602 = vunpack.c.l.b16 %v538
        %v603 = vunpack.c.l.b16 %v539
        %v604 = vunpack.c.l.b16 %v540
        %v605 = vunpack.c.l.b16 %v541
        %v606 = vunpack.c.l.b16 %v542
        %v607 = vunpack.c.l.b16 %v543
        %v608 = vunpack.c.l.b16 %v544
        %v609 = vunpack.c.l.b16 %v545
        %v610 = vunpack.c.l.b16 %v546
        %v611 = vunpack.c.l.b16 %v547
        %v612 = vunpack.c.l.b16 %v548
        %v613 = vunpack.c.l.b16 %v549
        %v614 = vunpack.c.l.b16 %v550
        %v615 = vunpack.c.l.b16 %v551
        %v616 = vunpack.c.l.b16 %v552
        %v617 = vunpack.c.l.b16 %v553
        %v618 = vunpack.c.l.b16 %v554
        %v619 = vunpack.c.l.b16 %v555
        %v620 = vunpack.c.l.b16 %v556
        %v621 = vunpack.c.l.b16 %v557
        %v622 = vunpack.c.l.b16 %v558
        %v623 = vunpack.c.l.b16 %v559
        %v624 = vunpack.c.l.b16 %v560
        %v625 = vunpack.c.l.b16 %v561
        %v626 = vunpack.c.l.b16 %v562
        %v627 = vunpack.c.l.b16 %v563
        %v628 = vunpack.c.l.b16 %v564
        %v629 = vunpack.c.l.b16 %v565
        %v630 = vpack.c.b16 %v599, %v598
        %v631 = vpack.c.b16 %v601, %v600
        %v632 = vpack.c.b16 %v603, %v602
        %v633 = vpack.c.b16 %v605, %v604
        %v634 = vpack.c.b16 %v607, %v606
        %v635 = vpack.c.b16 %v609, %v608
        %v636 = vpack.c.b16 %v611, %v610
        %v637 = vpack.c.b16 %v613, %v612
        %v638 = vpack.c.b16 %v615, %v614
        %v639 = vpack.c.b16 %v617, %v616
        %v640 = vpack.c.b16 %v619, %v618
        %v641 = vpack.c.b16 %v621, %v620
        %v642 = vpack.c.b16 %v623, %v622
        %v643 = vpack.c.b16 %v625, %v624
        %v644 = vpack.c.b16 %v627, %v626
        %v645 = vpack.c.b16 %v629, %v628
        %v647 = vsel %vm321, %v630, 0
        %v650 = vsel %vm321, %v631, 0
        %v653 = vsel %vm321, %v632, 0
        %v656 = vsel %vm321, %v633, 0
        %v659 = vsel %vm321, %v634, 0
        %v662 = vsel %vm321, %v635, 0
        %v665 = vsel %vm321, %v636, 0
        %v668 = vsel %vm321, %v637, 0
        %v671 = vsel %vm321, %v638, 0
        %v674 = vsel %vm321, %v639, 0
        %v677 = vsel %vm321, %v640, 0
        %v680 = vsel %vm321, %v641, 0
        %v683 = vsel %vm321, %v642, 0
        %v686 = vsel %vm321, %v643, 0
        %v689 = vsel %vm321, %v644, 0
        %v692 = vsel %vm321, %v645, 0
        %694 = vmatprep.subr.bf16.mxu0 0
        %695 = vmatpush1.bf16.msra.mxu0 %v205
        %696 = vmatprep.subr.bf16.mxu0 0
        %697 = vmatpush1.bf16.msra.mxu0 %v206
        %698 = vmatprep.subr.bf16.mxu0 0
        %699 = vmatpush1.bf16.msra.mxu0 %v207
        %700 = vmatprep.subr.bf16.mxu0 0
        %701 = vmatpush1.bf16.msra.mxu0 %v208
        %702 = vmatprep.subr.bf16.mxu0 0
        %703 = vmatpush1.bf16.msra.mxu0 0
        %704 = vmatprep.subr.bf16.mxu0 0
        %705 = vmatpush1.bf16.msra.mxu0 0
        %706 = vmatprep.subr.bf16.mxu0 0
        %707 = vmatpush1.bf16.msra.mxu0 0
        %708 = vmatprep.subr.bf16.mxu0 0
        %709 = vmatpush1.bf16.msra.mxu0 0
        %710 = vmatprep.subr.bf16.mxu0 0
        %711 = vmatpush1.bf16.msra.mxu0 0
        %712 = vmatprep.subr.bf16.mxu0 0
        %713 = vmatpush1.bf16.msra.mxu0 0
        %714 = vmatprep.subr.bf16.mxu0 0
        %715 = vmatpush1.bf16.msra.mxu0 0
        %716 = vmatprep.subr.bf16.mxu0 0
        %717 = vmatpush1.bf16.msra.mxu0 0
        %718 = vmatprep.subr.bf16.mxu0 0
        %719 = vmatpush1.bf16.msra.mxu0 0
        %720 = vmatprep.subr.bf16.mxu0 0
        %721 = vmatpush1.bf16.msra.mxu0 0
        %722 = vmatprep.subr.bf16.mxu0 0
        %723 = vmatpush1.bf16.msra.mxu0 0
        %724 = vmatprep.subr.bf16.mxu0 0
        %725 = vmatpush1.bf16.msra.mxu0 0
        %726 = vmatprep.mubr.bf16.mxu0 0
        %727 = vmatmul.mubr.bf16.gmra.mrb[0].mxu0 %v647
        %v728 = vpop.f32.mrb[0].mxu0
        %v729 = vadd.f32 0.0, %v728
        %v730 = vpop.f32.mrb[0].mxu0
        %v731 = vpop.f32.mrb[0].mxu0
        %v732 = vadd.f32 0.0, %v731
        %v733 = vpop.f32.mrb[0].mxu0
        %734 = vmatprep.mubr.bf16.mxu0 0
        %735 = vmatmul.mubr.bf16.gmra.mrb[0].mxu0 %v650
        %v736 = vpop.f32.mrb[0].mxu0
        %v737 = vadd.f32 0.0, %v736
        %v738 = vpop.f32.mrb[0].mxu0
        %v739 = vpop.f32.mrb[0].mxu0
        %v740 = vadd.f32 0.0, %v739
        %v741 = vpop.f32.mrb[0].mxu0
        %742 = vmatprep.mubr.bf16.mxu0 0
        %743 = vmatmul.mubr.bf16.gmra.mrb[0].mxu0 %v653
        %v744 = vpop.f32.mrb[0].mxu0
        %v745 = vadd.f32 0.0, %v744
        %v746 = vpop.f32.mrb[0].mxu0
        %v747 = vpop.f32.mrb[0].mxu0
        %v748 = vadd.f32 0.0, %v747
        %v749 = vpop.f32.mrb[0].mxu0
        %750 = vmatprep.mubr.bf16.mxu0 0
        %751 = vmatmul.mubr.bf16.gmra.mrb[0].mxu0 %v656
        %v752 = vpop.f32.mrb[0].mxu0
        %v753 = vadd.f32 0.0, %v752
        %v754 = vpop.f32.mrb[0].mxu0
        %v755 = vpop.f32.mrb[0].mxu0
        %v756 = vadd.f32 0.0, %v755
        %v757 = vpop.f32.mrb[0].mxu0
        %758 = vmatprep.mubr.bf16.mxu0 0
        %759 = vmatmul.mubr.bf16.gmra.mrb[0].mxu0 %v659
        %v760 = vpop.f32.mrb[0].mxu0
        %v761 = vadd.f32 0.0, %v760
        %v762 = vpop.f32.mrb[0].mxu0
        %v763 = vpop.f32.mrb[0].mxu0
        %v764 = vadd.f32 0.0, %v763
        %v765 = vpop.f32.mrb[0].mxu0
        %766 = vmatprep.mubr.bf16.mxu0 0
        %767 = vmatmul.mubr.bf16.gmra.mrb[0].mxu0 %v662
        %v768 = vpop.f32.mrb[0].mxu0
        %v769 = vadd.f32 0.0, %v768
        %v770 = vpop.f32.mrb[0].mxu0
        %v771 = vpop.f32.mrb[0].mxu0
        %v772 = vadd.f32 0.0, %v771
        %v773 = vpop.f32.mrb[0].mxu0
        %774 = vmatprep.mubr.bf16.mxu0 0
        %775 = vmatmul.mubr.bf16.gmra.mrb[0].mxu0 %v665
        %v776 = vpop.f32.mrb[0].mxu0
        %v777 = vadd.f32 0.0, %v776
        %v778 = vpop.f32.mrb[0].mxu0
        %v779 = vpop.f32.mrb[0].mxu0
        %v780 = vadd.f32 0.0, %v779
        %v781 = vpop.f32.mrb[0].mxu0
        %782 = vmatprep.mubr.bf16.mxu0 0
        %783 = vmatmul.mubr.bf16.gmra.mrb[0].mxu0 %v668
        %v784 = vpop.f32.mrb[0].mxu0
        %v785 = vadd.f32 0.0, %v784
        %v786 = vpop.f32.mrb[0].mxu0
        %v787 = vpop.f32.mrb[0].mxu0
        %v788 = vadd.f32 0.0, %v787
        %v789 = vpop.f32.mrb[0].mxu0
        %790 = vmatprep.mubr.bf16.mxu0 0
        %791 = vmatmul.mubr.bf16.gmra.mrb[0].mxu0 %v671
        %v792 = vpop.f32.mrb[0].mxu0
        %v793 = vadd.f32 0.0, %v792
        %v794 = vpop.f32.mrb[0].mxu0
        %v795 = vpop.f32.mrb[0].mxu0
        %v796 = vadd.f32 0.0, %v795
        %v797 = vpop.f32.mrb[0].mxu0
        %798 = vmatprep.mubr.bf16.mxu0 0
        %799 = vmatmul.mubr.bf16.gmra.mrb[0].mxu0 %v674
        %v800 = vpop.f32.mrb[0].mxu0
        %v801 = vadd.f32 0.0, %v800
        %v802 = vpop.f32.mrb[0].mxu0
        %v803 = vpop.f32.mrb[0].mxu0
        %v804 = vadd.f32 0.0, %v803
        %v805 = vpop.f32.mrb[0].mxu0
        %806 = vmatprep.mubr.bf16.mxu0 0
        %807 = vmatmul.mubr.bf16.gmra.mrb[0].mxu0 %v677
        %v808 = vpop.f32.mrb[0].mxu0
        %v809 = vadd.f32 0.0, %v808
        %v810 = vpop.f32.mrb[0].mxu0
        %v811 = vpop.f32.mrb[0].mxu0
        %v812 = vadd.f32 0.0, %v811
        %v813 = vpop.f32.mrb[0].mxu0
        %814 = vmatprep.mubr.bf16.mxu0 0
        %815 = vmatmul.mubr.bf16.gmra.mrb[0].mxu0 %v680
        %v816 = vpop.f32.mrb[0].mxu0
        %v817 = vadd.f32 0.0, %v816
        %v818 = vpop.f32.mrb[0].mxu0
        %v819 = vpop.f32.mrb[0].mxu0
        %v820 = vadd.f32 0.0, %v819
        %v821 = vpop.f32.mrb[0].mxu0
        %822 = vmatprep.mubr.bf16.mxu0 0
        %823 = vmatmul.mubr.bf16.gmra.mrb[0].mxu0 %v683
        %v824 = vpop.f32.mrb[0].mxu0
        %v825 = vadd.f32 0.0, %v824
        %v826 = vpop.f32.mrb[0].mxu0
        %v827 = vpop.f32.mrb[0].mxu0
        %v828 = vadd.f32 0.0, %v827
        %v829 = vpop.f32.mrb[0].mxu0
        %830 = vmatprep.mubr.bf16.mxu0 0
        %831 = vmatmul.mubr.bf16.gmra.mrb[0].mxu0 %v686
        %v832 = vpop.f32.mrb[0].mxu0
        %v833 = vadd.f32 0.0, %v832
        %v834 = vpop.f32.mrb[0].mxu0
        %v835 = vpop.f32.mrb[0].mxu0
        %v836 = vadd.f32 0.0, %v835
        %v837 = vpop.f32.mrb[0].mxu0
        %838 = vmatprep.mubr.bf16.mxu0 0
        %839 = vmatmul.mubr.bf16.gmra.mrb[0].mxu0 %v689
        %v840 = vpop.f32.mrb[0].mxu0
        %v841 = vadd.f32 0.0, %v840
        %v842 = vpop.f32.mrb[0].mxu0
        %v843 = vpop.f32.mrb[0].mxu0
        %v844 = vadd.f32 0.0, %v843
        %v845 = vpop.f32.mrb[0].mxu0
        %846 = vmatprep.mubr.bf16.mxu0 0
        %847 = vmatmul.mubr.bf16.gmra.mrb[0].mxu0 %v692
        %v848 = vpop.f32.mrb[0].mxu0
        %v849 = vadd.f32 0.0, %v848
        %v850 = vpop.f32.mrb[0].mxu0
        %v851 = vpop.f32.mrb[0].mxu0
        %v852 = vadd.f32 0.0, %v851
        %v853 = vpop.f32.mrb[0].mxu0
        %854 = vdwg.mxu0
        %s855 = scalar_lea.vmem %s2, 16
        %v856 = vld [vmem:[%s855] sm:$0xff]
        %v857 = vld [vmem:[%s855 + $0x8] sm:$0xff]
        %vm858 = vcmask 130048
        %v860 = vsel %vm858, %v729, 0
        %v863 = vsel %vm858, %v732, 0
        %v866 = vsel %vm858, %v737, 0
        %v869 = vsel %vm858, %v740, 0
        %v872 = vsel %vm858, %v745, 0
        %v875 = vsel %vm858, %v748, 0
        %v878 = vsel %vm858, %v753, 0
        %v881 = vsel %vm858, %v756, 0
        %v884 = vsel %vm858, %v761, 0
        %v887 = vsel %vm858, %v764, 0
        %v890 = vsel %vm858, %v769, 0
        %v893 = vsel %vm858, %v772, 0
        %v896 = vsel %vm858, %v777, 0
        %v899 = vsel %vm858, %v780, 0
        %v902 = vsel %vm858, %v785, 0
        %v905 = vsel %vm858, %v788, 0
        %v908 = vsel %vm858, %v793, 0
        %v911 = vsel %vm858, %v796, 0
        %v914 = vsel %vm858, %v801, 0
        %v917 = vsel %vm858, %v804, 0
        %v920 = vsel %vm858, %v809, 0
        %v923 = vsel %vm858, %v812, 0
        %v926 = vsel %vm858, %v817, 0
        %v929 = vsel %vm858, %v820, 0
        %v932 = vsel %vm858, %v825, 0
        %v935 = vsel %vm858, %v828, 0
        %v938 = vsel %vm858, %v833, 0
        %v941 = vsel %vm858, %v836, 0
        %v944 = vsel %vm858, %v841, 0
        %v947 = vsel %vm858, %v844, 0
        %v950 = vsel %vm858, %v849, 0
        %v953 = vsel %vm858, %v852, 0
        %955 = vmatprep.subr.mxu0 0.0
        %956 = vmatpush1.msra.mxu0 %v856
        %957 = vmatprep.subr.mxu0 0.0
        %958 = vmatpush1.msra.mxu0 %v857
        %959 = vmatprep.subr.mxu0 0.0
        %960 = vmatpush1.msra.mxu0 0.0
        %961 = vmatprep.subr.mxu0 0.0
        %962 = vmatpush1.msra.mxu0 0.0
        %963 = vmatprep.subr.mxu0 0.0
        %964 = vmatpush1.msra.mxu0 0.0
        %965 = vmatprep.subr.mxu0 0.0
        %966 = vmatpush1.msra.mxu0 0.0
        %967 = vmatprep.subr.mxu0 0.0
        %968 = vmatpush1.msra.mxu0 0.0
        %969 = vmatprep.subr.mxu0 0.0
        %970 = vmatpush1.msra.mxu0 0.0
        %971 = vmatprep.subr.mxu0 0.0
        %972 = vmatpush1.msra.mxu0 0.0
        %973 = vmatprep.subr.mxu0 0.0
        %974 = vmatpush1.msra.mxu0 0.0
        %975 = vmatprep.subr.mxu0 0.0
        %976 = vmatpush1.msra.mxu0 0.0
        %977 = vmatprep.subr.mxu0 0.0
        %978 = vmatpush1.msra.mxu0 0.0
        %979 = vmatprep.subr.mxu0 0.0
        %980 = vmatpush1.msra.mxu0 0.0
        %981 = vmatprep.subr.mxu0 0.0
        %982 = vmatpush1.msra.mxu0 0.0
        %983 = vmatprep.subr.mxu0 0.0
        %984 = vmatpush1.msra.mxu0 0.0
        %985 = vmatprep.subr.mxu0 0.0
        %986 = vmatpush1.msra.mxu0 0.0
        %987 = vmatprep.subr.mxu0 0.0
        %988 = vmatpush1.msra.mxu0 0.0
        %989 = vmatprep.subr.mxu0 0.0
        %990 = vmatpush1.msra.mxu0 0.0
        %991 = vmatprep.subr.mxu0 0.0
        %992 = vmatpush1.msra.mxu0 0.0
        %993 = vmatprep.subr.mxu0 0.0
        %994 = vmatpush1.msra.mxu0 0.0
        %995 = vmatprep.subr.mxu0 0.0
        %996 = vmatpush1.msra.mxu0 0.0
        %997 = vmatprep.subr.mxu0 0.0
        %998 = vmatpush1.msra.mxu0 0.0
        %999 = vmatprep.subr.mxu0 0.0
        %1000 = vmatpush1.msra.mxu0 0.0
        %1001 = vmatprep.subr.mxu0 0.0
        %1002 = vmatpush1.msra.mxu0 0.0
        %1003 = vmatprep.subr.mxu0 0.0
        %1004 = vmatpush1.msra.mxu0 0.0
        %1005 = vmatprep.subr.mxu0 0.0
        %1006 = vmatpush1.msra.mxu0 0.0
        %1007 = vmatprep.subr.mxu0 0.0
        %1008 = vmatpush1.msra.mxu0 0.0
        %1009 = vmatprep.subr.mxu0 0.0
        %1010 = vmatpush1.msra.mxu0 0.0
        %1011 = vmatprep.subr.mxu0 0.0
        %1012 = vmatpush1.msra.mxu0 0.0
        %1013 = vmatprep.subr.mxu0 0.0
        %1014 = vmatpush1.msra.mxu0 0.0
        %1015 = vmatprep.subr.mxu0 0.0
        %1016 = vmatpush1.msra.mxu0 0.0
        %1017 = vmatprep.subr.mxu0 0.0
        %1018 = vmatpush1.msra.mxu0 0.0
        %1019 = vmatprep.mubr.f32.mxu0 0.0
        %1020 = vmatmul.mubr.f32.gmra.mrb[0].mxu0 %v860
        %v1021 = vpop.f32.mrb[0].mxu0
        %v1022 = vadd.f32 0.0, %v1021
        %v1023 = vpop.f32.mrb[0].mxu0
        %1024 = vmatprep.mubr.f32.mxu0 0.0
        %1025 = vmatmul.mubr.f32.gmra.mrb[0].mxu0 %v863
        %v1026 = vpop.f32.mrb[0].mxu0
        %v1027 = vadd.f32 0.0, %v1026
        %v1028 = vpop.f32.mrb[0].mxu0
        %1029 = vmatprep.mubr.f32.mxu0 0.0
        %1030 = vmatmul.mubr.f32.gmra.mrb[0].mxu0 %v866
        %v1031 = vpop.f32.mrb[0].mxu0
        %v1032 = vadd.f32 0.0, %v1031
        %v1033 = vpop.f32.mrb[0].mxu0
        %1034 = vmatprep.mubr.f32.mxu0 0.0
        %1035 = vmatmul.mubr.f32.gmra.mrb[0].mxu0 %v869
        %v1036 = vpop.f32.mrb[0].mxu0
        %v1037 = vadd.f32 0.0, %v1036
        %v1038 = vpop.f32.mrb[0].mxu0
        %1039 = vmatprep.mubr.f32.mxu0 0.0
        %1040 = vmatmul.mubr.f32.gmra.mrb[0].mxu0 %v872
        %v1041 = vpop.f32.mrb[0].mxu0
        %v1042 = vadd.f32 0.0, %v1041
        %v1043 = vpop.f32.mrb[0].mxu0
        %1044 = vmatprep.mubr.f32.mxu0 0.0
        %1045 = vmatmul.mubr.f32.gmra.mrb[0].mxu0 %v875
        %v1046 = vpop.f32.mrb[0].mxu0
        %v1047 = vadd.f32 0.0, %v1046
        %v1048 = vpop.f32.mrb[0].mxu0
        %1049 = vmatprep.mubr.f32.mxu0 0.0
        %1050 = vmatmul.mubr.f32.gmra.mrb[0].mxu0 %v878
        %v1051 = vpop.f32.mrb[0].mxu0
        %v1052 = vadd.f32 0.0, %v1051
        %v1053 = vpop.f32.mrb[0].mxu0
        %1054 = vmatprep.mubr.f32.mxu0 0.0
        %1055 = vmatmul.mubr.f32.gmra.mrb[0].mxu0 %v881
        %v1056 = vpop.f32.mrb[0].mxu0
        %v1057 = vadd.f32 0.0, %v1056
        %v1058 = vpop.f32.mrb[0].mxu0
        %1059 = vmatprep.mubr.f32.mxu0 0.0
        %1060 = vmatmul.mubr.f32.gmra.mrb[0].mxu0 %v884
        %v1061 = vpop.f32.mrb[0].mxu0
        %v1062 = vadd.f32 0.0, %v1061
        %v1063 = vpop.f32.mrb[0].mxu0
        %1064 = vmatprep.mubr.f32.mxu0 0.0
        %1065 = vmatmul.mubr.f32.gmra.mrb[0].mxu0 %v887
        %v1066 = vpop.f32.mrb[0].mxu0
        %v1067 = vadd.f32 0.0, %v1066
        %v1068 = vpop.f32.mrb[0].mxu0
        %1069 = vmatprep.mubr.f32.mxu0 0.0
        %1070 = vmatmul.mubr.f32.gmra.mrb[0].mxu0 %v890
        %v1071 = vpop.f32.mrb[0].mxu0
        %v1072 = vadd.f32 0.0, %v1071
        %v1073 = vpop.f32.mrb[0].mxu0
        %1074 = vmatprep.mubr.f32.mxu0 0.0
        %1075 = vmatmul.mubr.f32.gmra.mrb[0].mxu0 %v893
        %v1076 = vpop.f32.mrb[0].mxu0
        %v1077 = vadd.f32 0.0, %v1076
        %v1078 = vpop.f32.mrb[0].mxu0
        %1079 = vmatprep.mubr.f32.mxu0 0.0
        %1080 = vmatmul.mubr.f32.gmra.mrb[0].mxu0 %v896
        %v1081 = vpop.f32.mrb[0].mxu0
        %v1082 = vadd.f32 0.0, %v1081
        %v1083 = vpop.f32.mrb[0].mxu0
        %1084 = vmatprep.mubr.f32.mxu0 0.0
        %1085 = vmatmul.mubr.f32.gmra.mrb[0].mxu0 %v899
        %v1086 = vpop.f32.mrb[0].mxu0
        %v1087 = vadd.f32 0.0, %v1086
        %v1088 = vpop.f32.mrb[0].mxu0
        %1089 = vmatprep.mubr.f32.mxu0 0.0
        %1090 = vmatmul.mubr.f32.gmra.mrb[0].mxu0 %v902
        %v1091 = vpop.f32.mrb[0].mxu0
        %v1092 = vadd.f32 0.0, %v1091
        %v1093 = vpop.f32.mrb[0].mxu0
        %1094 = vmatprep.mubr.f32.mxu0 0.0
        %1095 = vmatmul.mubr.f32.gmra.mrb[0].mxu0 %v905
        %v1096 = vpop.f32.mrb[0].mxu0
        %v1097 = vadd.f32 0.0, %v1096
        %v1098 = vpop.f32.mrb[0].mxu0
        %1099 = vmatprep.mubr.f32.mxu0 0.0
        %1100 = vmatmul.mubr.f32.gmra.mrb[0].mxu0 %v908
        %v1101 = vpop.f32.mrb[0].mxu0
        %v1102 = vadd.f32 0.0, %v1101
        %v1103 = vpop.f32.mrb[0].mxu0
        %1104 = vmatprep.mubr.f32.mxu0 0.0
        %1105 = vmatmul.mubr.f32.gmra.mrb[0].mxu0 %v911
        %v1106 = vpop.f32.mrb[0].mxu0
        %v1107 = vadd.f32 0.0, %v1106
        %v1108 = vpop.f32.mrb[0].mxu0
        %1109 = vmatprep.mubr.f32.mxu0 0.0
        %1110 = vmatmul.mubr.f32.gmra.mrb[0].mxu0 %v914
        %v1111 = vpop.f32.mrb[0].mxu0
        %v1112 = vadd.f32 0.0, %v1111
        %v1113 = vpop.f32.mrb[0].mxu0
        %1114 = vmatprep.mubr.f32.mxu0 0.0
        %1115 = vmatmul.mubr.f32.gmra.mrb[0].mxu0 %v917
        %v1116 = vpop.f32.mrb[0].mxu0
        %v1117 = vadd.f32 0.0, %v1116
        %v1118 = vpop.f32.mrb[0].mxu0
        %1119 = vmatprep.mubr.f32.mxu0 0.0
        %1120 = vmatmul.mubr.f32.gmra.mrb[0].mxu0 %v920
        %v1121 = vpop.f32.mrb[0].mxu0
        %v1122 = vadd.f32 0.0, %v1121
        %v1123 = vpop.f32.mrb[0].mxu0
        %1124 = vmatprep.mubr.f32.mxu0 0.0
        %1125 = vmatmul.mubr.f32.gmra.mrb[0].mxu0 %v923
        %v1126 = vpop.f32.mrb[0].mxu0
        %v1127 = vadd.f32 0.0, %v1126
        %v1128 = vpop.f32.mrb[0].mxu0
        %1129 = vmatprep.mubr.f32.mxu0 0.0
        %1130 = vmatmul.mubr.f32.gmra.mrb[0].mxu0 %v926
        %v1131 = vpop.f32.mrb[0].mxu0
        %v1132 = vadd.f32 0.0, %v1131
        %v1133 = vpop.f32.mrb[0].mxu0
        %1134 = vmatprep.mubr.f32.mxu0 0.0
        %1135 = vmatmul.mubr.f32.gmra.mrb[0].mxu0 %v929
        %v1136 = vpop.f32.mrb[0].mxu0
        %v1137 = vadd.f32 0.0, %v1136
        %v1138 = vpop.f32.mrb[0].mxu0
        %1139 = vmatprep.mubr.f32.mxu0 0.0
        %1140 = vmatmul.mubr.f32.gmra.mrb[0].mxu0 %v932
        %v1141 = vpop.f32.mrb[0].mxu0
        %v1142 = vadd.f32 0.0, %v1141
        %v1143 = vpop.f32.mrb[0].mxu0
        %1144 = vmatprep.mubr.f32.mxu0 0.0
        %1145 = vmatmul.mubr.f32.gmra.mrb[0].mxu0 %v935
        %v1146 = vpop.f32.mrb[0].mxu0
        %v1147 = vadd.f32 0.0, %v1146
        %v1148 = vpop.f32.mrb[0].mxu0
        %1149 = vmatprep.mubr.f32.mxu0 0.0
        %1150 = vmatmul.mubr.f32.gmra.mrb[0].mxu0 %v938
        %v1151 = vpop.f32.mrb[0].mxu0
        %v1152 = vadd.f32 0.0, %v1151
        %v1153 = vpop.f32.mrb[0].mxu0
        %1154 = vmatprep.mubr.f32.mxu0 0.0
        %1155 = vmatmul.mubr.f32.gmra.mrb[0].mxu0 %v941
        %v1156 = vpop.f32.mrb[0].mxu0
        %v1157 = vadd.f32 0.0, %v1156
        %v1158 = vpop.f32.mrb[0].mxu0
        %1159 = vmatprep.mubr.f32.mxu0 0.0
        %1160 = vmatmul.mubr.f32.gmra.mrb[0].mxu0 %v944
        %v1161 = vpop.f32.mrb[0].mxu0
        %v1162 = vadd.f32 0.0, %v1161
        %v1163 = vpop.f32.mrb[0].mxu0
        %1164 = vmatprep.mubr.f32.mxu0 0.0
        %1165 = vmatmul.mubr.f32.gmra.mrb[0].mxu0 %v947
        %v1166 = vpop.f32.mrb[0].mxu0
        %v1167 = vadd.f32 0.0, %v1166
        %v1168 = vpop.f32.mrb[0].mxu0
        %1169 = vmatprep.mubr.f32.mxu0 0.0
        %1170 = vmatmul.mubr.f32.gmra.mrb[0].mxu0 %v950
        %v1171 = vpop.f32.mrb[0].mxu0
        %v1172 = vadd.f32 0.0, %v1171
        %v1173 = vpop.f32.mrb[0].mxu0
        %1174 = vmatprep.mubr.f32.mxu0 0.0
        %1175 = vmatmul.mubr.f32.gmra.mrb[0].mxu0 %v953
        %v1176 = vpop.f32.mrb[0].mxu0
        %v1177 = vadd.f32 0.0, %v1176
        %v1178 = vpop.f32.mrb[0].mxu0
        %1179 = vdwg.mxu0
        %v1181 = vsel %vm858, %v405, 0
        %v1184 = vsel %vm858, %v408, 0
        %v1187 = vsel %vm858, %v413, 0
        %v1190 = vsel %vm858, %v416, 0
        %v1193 = vsel %vm858, %v421, 0
        %v1196 = vsel %vm858, %v424, 0
        %v1199 = vsel %vm858, %v429, 0
        %v1202 = vsel %vm858, %v432, 0
        %v1205 = vsel %vm858, %v437, 0
        %v1208 = vsel %vm858, %v440, 0
        %v1211 = vsel %vm858, %v445, 0
        %v1214 = vsel %vm858, %v448, 0
        %v1217 = vsel %vm858, %v453, 0
        %v1220 = vsel %vm858, %v456, 0
        %v1223 = vsel %vm858, %v461, 0
        %v1226 = vsel %vm858, %v464, 0
        %v1229 = vsel %vm858, %v469, 0
        %v1232 = vsel %vm858, %v472, 0
        %v1235 = vsel %vm858, %v477, 0
        %v1238 = vsel %vm858, %v480, 0
        %v1241 = vsel %vm858, %v485, 0
        %v1244 = vsel %vm858, %v488, 0
        %v1247 = vsel %vm858, %v493, 0
        %v1250 = vsel %vm858, %v496, 0
        %v1253 = vsel %vm858, %v501, 0
        %v1256 = vsel %vm858, %v504, 0
        %v1259 = vsel %vm858, %v509, 0
        %v1262 = vsel %vm858, %v512, 0
        %v1265 = vsel %vm858, %v517, 0
        %v1268 = vsel %vm858, %v520, 0
        %v1271 = vsel %vm858, %v525, 0
        %v1274 = vsel %vm858, %v528, 0
        %1276 = vmatprep.subr.mxu0 0.0
        %1277 = vmatpush1.msra.mxu0 %v531
        %1278 = vmatprep.subr.mxu0 0.0
        %1279 = vmatpush1.msra.mxu0 %v532
        %1280 = vmatprep.subr.mxu0 0.0
        %1281 = vmatpush1.msra.mxu0 0.0
        %1282 = vmatprep.subr.mxu0 0.0
        %1283 = vmatpush1.msra.mxu0 0.0
        %1284 = vmatprep.subr.mxu0 0.0
        %1285 = vmatpush1.msra.mxu0 0.0
        %1286 = vmatprep.subr.mxu0 0.0
        %1287 = vmatpush1.msra.mxu0 0.0
        %1288 = vmatprep.subr.mxu0 0.0
        %1289 = vmatpush1.msra.mxu0 0.0
        %1290 = vmatprep.subr.mxu0 0.0
        %1291 = vmatpush1.msra.mxu0 0.0
        %1292 = vmatprep.subr.mxu0 0.0
        %1293 = vmatpush1.msra.mxu0 0.0
        %1294 = vmatprep.subr.mxu0 0.0
        %1295 = vmatpush1.msra.mxu0 0.0
        %1296 = vmatprep.subr.mxu0 0.0
        %1297 = vmatpush1.msra.mxu0 0.0
        %1298 = vmatprep.subr.mxu0 0.0
        %1299 = vmatpush1.msra.mxu0 0.0
        %1300 = vmatprep.subr.mxu0 0.0
        %1301 = vmatpush1.msra.mxu0 0.0
        %1302 = vmatprep.subr.mxu0 0.0
        %1303 = vmatpush1.msra.mxu0 0.0
        %1304 = vmatprep.subr.mxu0 0.0
        %1305 = vmatpush1.msra.mxu0 0.0
        %1306 = vmatprep.subr.mxu0 0.0
        %1307 = vmatpush1.msra.mxu0 0.0
        %1308 = vmatprep.subr.mxu0 0.0
        %1309 = vmatpush1.msra.mxu0 0.0
        %1310 = vmatprep.subr.mxu0 0.0
        %1311 = vmatpush1.msra.mxu0 0.0
        %1312 = vmatprep.subr.mxu0 0.0
        %1313 = vmatpush1.msra.mxu0 0.0
        %1314 = vmatprep.subr.mxu0 0.0
        %1315 = vmatpush1.msra.mxu0 0.0
        %1316 = vmatprep.subr.mxu0 0.0
        %1317 = vmatpush1.msra.mxu0 0.0
        %1318 = vmatprep.subr.mxu0 0.0
        %1319 = vmatpush1.msra.mxu0 0.0
        %1320 = vmatprep.subr.mxu0 0.0
        %1321 = vmatpush1.msra.mxu0 0.0
        %1322 = vmatprep.subr.mxu0 0.0
        %1323 = vmatpush1.msra.mxu0 0.0
        %1324 = vmatprep.subr.mxu0 0.0
        %1325 = vmatpush1.msra.mxu0 0.0
        %1326 = vmatprep.subr.mxu0 0.0
        %1327 = vmatpush1.msra.mxu0 0.0
        %1328 = vmatprep.subr.mxu0 0.0
        %1329 = vmatpush1.msra.mxu0 0.0
        %1330 = vmatprep.subr.mxu0 0.0
        %1331 = vmatpush1.msra.mxu0 0.0
        %1332 = vmatprep.subr.mxu0 0.0
        %1333 = vmatpush1.msra.mxu0 0.0
        %1334 = vmatprep.subr.mxu0 0.0
        %1335 = vmatpush1.msra.mxu0 0.0
        %1336 = vmatprep.subr.mxu0 0.0
        %1337 = vmatpush1.msra.mxu0 0.0
        %1338 = vmatprep.subr.mxu0 0.0
        %1339 = vmatpush1.msra.mxu0 0.0
        %1340 = vmatprep.mubr.f32.mxu0 0.0
        %1341 = vmatmul.mubr.f32.gmra.mrb[0].mxu0 %v1181
        %v1342 = vpop.f32.mrb[0].mxu0
        %v1343 = vadd.f32 %v1022, %v1342
        %v1344 = vpop.f32.mrb[0].mxu0
        %1345 = vmatprep.mubr.f32.mxu0 0.0
        %1346 = vmatmul.mubr.f32.gmra.mrb[0].mxu0 %v1184
        %v1347 = vpop.f32.mrb[0].mxu0
        %v1348 = vadd.f32 %v1027, %v1347
        %v1349 = vpop.f32.mrb[0].mxu0
        %1350 = vmatprep.mubr.f32.mxu0 0.0
        %1351 = vmatmul.mubr.f32.gmra.mrb[0].mxu0 %v1187
        %v1352 = vpop.f32.mrb[0].mxu0
        %v1353 = vadd.f32 %v1032, %v1352
        %v1354 = vpop.f32.mrb[0].mxu0
        %1355 = vmatprep.mubr.f32.mxu0 0.0
        %1356 = vmatmul.mubr.f32.gmra.mrb[0].mxu0 %v1190
        %v1357 = vpop.f32.mrb[0].mxu0
        %v1358 = vadd.f32 %v1037, %v1357
        %v1359 = vpop.f32.mrb[0].mxu0
        %1360 = vmatprep.mubr.f32.mxu0 0.0
        %1361 = vmatmul.mubr.f32.gmra.mrb[0].mxu0 %v1193
        %v1362 = vpop.f32.mrb[0].mxu0
        %v1363 = vadd.f32 %v1042, %v1362
        %v1364 = vpop.f32.mrb[0].mxu0
        %1365 = vmatprep.mubr.f32.mxu0 0.0
        %1366 = vmatmul.mubr.f32.gmra.mrb[0].mxu0 %v1196
        %v1367 = vpop.f32.mrb[0].mxu0
        %v1368 = vadd.f32 %v1047, %v1367
        %v1369 = vpop.f32.mrb[0].mxu0
        %1370 = vmatprep.mubr.f32.mxu0 0.0
        %1371 = vmatmul.mubr.f32.gmra.mrb[0].mxu0 %v1199
        %v1372 = vpop.f32.mrb[0].mxu0
        %v1373 = vadd.f32 %v1052, %v1372
        %v1374 = vpop.f32.mrb[0].mxu0
        %1375 = vmatprep.mubr.f32.mxu0 0.0
        %1376 = vmatmul.mubr.f32.gmra.mrb[0].mxu0 %v1202
        %v1377 = vpop.f32.mrb[0].mxu0
        %v1378 = vadd.f32 %v1057, %v1377
        %v1379 = vpop.f32.mrb[0].mxu0
        %1380 = vmatprep.mubr.f32.mxu0 0.0
        %1381 = vmatmul.mubr.f32.gmra.mrb[0].mxu0 %v1205
        %v1382 = vpop.f32.mrb[0].mxu0
        %v1383 = vadd.f32 %v1062, %v1382
        %v1384 = vpop.f32.mrb[0].mxu0
        %1385 = vmatprep.mubr.f32.mxu0 0.0
        %1386 = vmatmul.mubr.f32.gmra.mrb[0].mxu0 %v1208
        %v1387 = vpop.f32.mrb[0].mxu0
        %v1388 = vadd.f32 %v1067, %v1387
        %v1389 = vpop.f32.mrb[0].mxu0
        %1390 = vmatprep.mubr.f32.mxu0 0.0
        %1391 = vmatmul.mubr.f32.gmra.mrb[0].mxu0 %v1211
        %v1392 = vpop.f32.mrb[0].mxu0
        %v1393 = vadd.f32 %v1072, %v1392
        %v1394 = vpop.f32.mrb[0].mxu0
        %1395 = vmatprep.mubr.f32.mxu0 0.0
        %1396 = vmatmul.mubr.f32.gmra.mrb[0].mxu0 %v1214
        %v1397 = vpop.f32.mrb[0].mxu0
        %v1398 = vadd.f32 %v1077, %v1397
        %v1399 = vpop.f32.mrb[0].mxu0
        %1400 = vmatprep.mubr.f32.mxu0 0.0
        %1401 = vmatmul.mubr.f32.gmra.mrb[0].mxu0 %v1217
        %v1402 = vpop.f32.mrb[0].mxu0
        %v1403 = vadd.f32 %v1082, %v1402
        %v1404 = vpop.f32.mrb[0].mxu0
        %1405 = vmatprep.mubr.f32.mxu0 0.0
        %1406 = vmatmul.mubr.f32.gmra.mrb[0].mxu0 %v1220
        %v1407 = vpop.f32.mrb[0].mxu0
        %v1408 = vadd.f32 %v1087, %v1407
        %v1409 = vpop.f32.mrb[0].mxu0
        %1410 = vmatprep.mubr.f32.mxu0 0.0
        %1411 = vmatmul.mubr.f32.gmra.mrb[0].mxu0 %v1223
        %v1412 = vpop.f32.mrb[0].mxu0
        %v1413 = vadd.f32 %v1092, %v1412
        %v1414 = vpop.f32.mrb[0].mxu0
        %1415 = vmatprep.mubr.f32.mxu0 0.0
        %1416 = vmatmul.mubr.f32.gmra.mrb[0].mxu0 %v1226
        %v1417 = vpop.f32.mrb[0].mxu0
        %v1418 = vadd.f32 %v1097, %v1417
        %v1419 = vpop.f32.mrb[0].mxu0
        %1420 = vmatprep.mubr.f32.mxu0 0.0
        %1421 = vmatmul.mubr.f32.gmra.mrb[0].mxu0 %v1229
        %v1422 = vpop.f32.mrb[0].mxu0
        %v1423 = vadd.f32 %v1102, %v1422
        %v1424 = vpop.f32.mrb[0].mxu0
        %1425 = vmatprep.mubr.f32.mxu0 0.0
        %1426 = vmatmul.mubr.f32.gmra.mrb[0].mxu0 %v1232
        %v1427 = vpop.f32.mrb[0].mxu0
        %v1428 = vadd.f32 %v1107, %v1427
        %v1429 = vpop.f32.mrb[0].mxu0
        %1430 = vmatprep.mubr.f32.mxu0 0.0
        %1431 = vmatmul.mubr.f32.gmra.mrb[0].mxu0 %v1235
        %v1432 = vpop.f32.mrb[0].mxu0
        %v1433 = vadd.f32 %v1112, %v1432
        %v1434 = vpop.f32.mrb[0].mxu0
        %1435 = vmatprep.mubr.f32.mxu0 0.0
        %1436 = vmatmul.mubr.f32.gmra.mrb[0].mxu0 %v1238
        %v1437 = vpop.f32.mrb[0].mxu0
        %v1438 = vadd.f32 %v1117, %v1437
        %v1439 = vpop.f32.mrb[0].mxu0
        %1440 = vmatprep.mubr.f32.mxu0 0.0
        %1441 = vmatmul.mubr.f32.gmra.mrb[0].mxu0 %v1241
        %v1442 = vpop.f32.mrb[0].mxu0
        %v1443 = vadd.f32 %v1122, %v1442
        %v1444 = vpop.f32.mrb[0].mxu0
        %1445 = vmatprep.mubr.f32.mxu0 0.0
        %1446 = vmatmul.mubr.f32.gmra.mrb[0].mxu0 %v1244
        %v1447 = vpop.f32.mrb[0].mxu0
        %v1448 = vadd.f32 %v1127, %v1447
        %v1449 = vpop.f32.mrb[0].mxu0
        %1450 = vmatprep.mubr.f32.mxu0 0.0
        %1451 = vmatmul.mubr.f32.gmra.mrb[0].mxu0 %v1247
        %v1452 = vpop.f32.mrb[0].mxu0
        %v1453 = vadd.f32 %v1132, %v1452
        %v1454 = vpop.f32.mrb[0].mxu0
        %1455 = vmatprep.mubr.f32.mxu0 0.0
        %1456 = vmatmul.mubr.f32.gmra.mrb[0].mxu0 %v1250
        %v1457 = vpop.f32.mrb[0].mxu0
        %v1458 = vadd.f32 %v1137, %v1457
        %v1459 = vpop.f32.mrb[0].mxu0
        %1460 = vmatprep.mubr.f32.mxu0 0.0
        %1461 = vmatmul.mubr.f32.gmra.mrb[0].mxu0 %v1253
        %v1462 = vpop.f32.mrb[0].mxu0
        %v1463 = vadd.f32 %v1142, %v1462
        %v1464 = vpop.f32.mrb[0].mxu0
        %1465 = vmatprep.mubr.f32.mxu0 0.0
        %1466 = vmatmul.mubr.f32.gmra.mrb[0].mxu0 %v1256
        %v1467 = vpop.f32.mrb[0].mxu0
        %v1468 = vadd.f32 %v1147, %v1467
        %v1469 = vpop.f32.mrb[0].mxu0
        %1470 = vmatprep.mubr.f32.mxu0 0.0
        %1471 = vmatmul.mubr.f32.gmra.mrb[0].mxu0 %v1259
        %v1472 = vpop.f32.mrb[0].mxu0
        %v1473 = vadd.f32 %v1152, %v1472
        %v1474 = vpop.f32.mrb[0].mxu0
        %1475 = vmatprep.mubr.f32.mxu0 0.0
        %1476 = vmatmul.mubr.f32.gmra.mrb[0].mxu0 %v1262
        %v1477 = vpop.f32.mrb[0].mxu0
        %v1478 = vadd.f32 %v1157, %v1477
        %v1479 = vpop.f32.mrb[0].mxu0
        %1480 = vmatprep.mubr.f32.mxu0 0.0
        %1481 = vmatmul.mubr.f32.gmra.mrb[0].mxu0 %v1265
        %v1482 = vpop.f32.mrb[0].mxu0
        %v1483 = vadd.f32 %v1162, %v1482
        %v1484 = vpop.f32.mrb[0].mxu0
        %1485 = vmatprep.mubr.f32.mxu0 0.0
        %1486 = vmatmul.mubr.f32.gmra.mrb[0].mxu0 %v1268
        %v1487 = vpop.f32.mrb[0].mxu0
        %v1488 = vadd.f32 %v1167, %v1487
        %v1489 = vpop.f32.mrb[0].mxu0
        %1490 = vmatprep.mubr.f32.mxu0 0.0
        %1491 = vmatmul.mubr.f32.gmra.mrb[0].mxu0 %v1271
        %v1492 = vpop.f32.mrb[0].mxu0
        %v1493 = vadd.f32 %v1172, %v1492
        %v1494 = vpop.f32.mrb[0].mxu0
        %1495 = vmatprep.mubr.f32.mxu0 0.0
        %1496 = vmatmul.mubr.f32.gmra.mrb[0].mxu0 %v1274
        %v1497 = vpop.f32.mrb[0].mxu0
        %v1498 = vadd.f32 %v1177, %v1497
        %v1499 = vpop.f32.mrb[0].mxu0
        %1500 = vdwg.mxu0
        %s1501 = scalar_lea.vmem %s1, 256
        %v1502 = vld [vmem:[%s1501] sm:$0xf]
        %v1503 = vld [vmem:[%s1501 + $0x4] sm:$0xf]
        %v1504 = vld [vmem:[%s1501 + $0x8] sm:$0xf]
        %v1505 = vld [vmem:[%s1501 + $0xc] sm:$0xf]
        %v1506 = vld [vmem:[%s1501 + $0x10] sm:$0xf]
        %v1507 = vld [vmem:[%s1501 + $0x14] sm:$0xf]
        %v1508 = vld [vmem:[%s1501 + $0x18] sm:$0xf]
        %v1509 = vld [vmem:[%s1501 + $0x1c] sm:$0xf]
        %v1510 = vld [vmem:[%s1501 + $0x20] sm:$0xf]
        %v1511 = vld [vmem:[%s1501 + $0x24] sm:$0xf]
        %v1512 = vld [vmem:[%s1501 + $0x28] sm:$0xf]
        %v1513 = vld [vmem:[%s1501 + $0x2c] sm:$0xf]
        %v1514 = vld [vmem:[%s1501 + $0x30] sm:$0xf]
        %v1515 = vld [vmem:[%s1501 + $0x34] sm:$0xf]
        %v1516 = vld [vmem:[%s1501 + $0x38] sm:$0xf]
        %v1517 = vld [vmem:[%s1501 + $0x3c] sm:$0xf]
        %v1518 = vld [vmem:[%s1501 + $0x40] sm:$0xf]
        %v1519 = vld [vmem:[%s1501 + $0x44] sm:$0xf]
        %v1520 = vld [vmem:[%s1501 + $0x48] sm:$0xf]
        %v1521 = vld [vmem:[%s1501 + $0x4c] sm:$0xf]
        %v1522 = vld [vmem:[%s1501 + $0x50] sm:$0xf]
        %v1523 = vld [vmem:[%s1501 + $0x54] sm:$0xf]
        %v1524 = vld [vmem:[%s1501 + $0x58] sm:$0xf]
        %v1525 = vld [vmem:[%s1501 + $0x5c] sm:$0xf]
        %v1526 = vld [vmem:[%s1501 + $0x60] sm:$0xf]
        %v1527 = vld [vmem:[%s1501 + $0x64] sm:$0xf]
        %v1528 = vld [vmem:[%s1501 + $0x68] sm:$0xf]
        %v1529 = vld [vmem:[%s1501 + $0x6c] sm:$0xf]
        %v1530 = vld [vmem:[%s1501 + $0x70] sm:$0xf]
        %v1531 = vld [vmem:[%s1501 + $0x74] sm:$0xf]
        %v1532 = vld [vmem:[%s1501 + $0x78] sm:$0xf]
        %v1533 = vld [vmem:[%s1501 + $0x7c] sm:$0xf]
        %v1566 = vunpack.c.l.b16 %v1502
        %v1567 = vunpack.c.l.b16 %v1503
        %v1568 = vunpack.c.l.b16 %v1504
        %v1569 = vunpack.c.l.b16 %v1505
        %v1570 = vunpack.c.l.b16 %v1506
        %v1571 = vunpack.c.l.b16 %v1507
        %v1572 = vunpack.c.l.b16 %v1508
        %v1573 = vunpack.c.l.b16 %v1509
        %v1574 = vunpack.c.l.b16 %v1510
        %v1575 = vunpack.c.l.b16 %v1511
        %v1576 = vunpack.c.l.b16 %v1512
        %v1577 = vunpack.c.l.b16 %v1513
        %v1578 = vunpack.c.l.b16 %v1514
        %v1579 = vunpack.c.l.b16 %v1515
        %v1580 = vunpack.c.l.b16 %v1516
        %v1581 = vunpack.c.l.b16 %v1517
        %v1582 = vunpack.c.l.b16 %v1518
        %v1583 = vunpack.c.l.b16 %v1519
        %v1584 = vunpack.c.l.b16 %v1520
        %v1585 = vunpack.c.l.b16 %v1521
        %v1586 = vunpack.c.l.b16 %v1522
        %v1587 = vunpack.c.l.b16 %v1523
        %v1588 = vunpack.c.l.b16 %v1524
        %v1589 = vunpack.c.l.b16 %v1525
        %v1590 = vunpack.c.l.b16 %v1526
        %v1591 = vunpack.c.l.b16 %v1527
        %v1592 = vunpack.c.l.b16 %v1528
        %v1593 = vunpack.c.l.b16 %v1529
        %v1594 = vunpack.c.l.b16 %v1530
        %v1595 = vunpack.c.l.b16 %v1531
        %v1596 = vunpack.c.l.b16 %v1532
        %v1597 = vunpack.c.l.b16 %v1533
        %v1598 = vpack.c.b16 %v1567, %v1566
        %v1599 = vpack.c.b16 %v1569, %v1568
        %v1600 = vpack.c.b16 %v1571, %v1570
        %v1601 = vpack.c.b16 %v1573, %v1572
        %v1602 = vpack.c.b16 %v1575, %v1574
        %v1603 = vpack.c.b16 %v1577, %v1576
        %v1604 = vpack.c.b16 %v1579, %v1578
        %v1605 = vpack.c.b16 %v1581, %v1580
        %v1606 = vpack.c.b16 %v1583, %v1582
        %v1607 = vpack.c.b16 %v1585, %v1584
        %v1608 = vpack.c.b16 %v1587, %v1586
        %v1609 = vpack.c.b16 %v1589, %v1588
        %v1610 = vpack.c.b16 %v1591, %v1590
        %v1611 = vpack.c.b16 %v1593, %v1592
        %v1612 = vpack.c.b16 %v1595, %v1594
        %v1613 = vpack.c.b16 %v1597, %v1596
        %v1615 = vsel %vm321, %v1598, 0
        %v1618 = vsel %vm321, %v1599, 0
        %v1621 = vsel %vm321, %v1600, 0
        %v1624 = vsel %vm321, %v1601, 0
        %v1627 = vsel %vm321, %v1602, 0
        %v1630 = vsel %vm321, %v1603, 0
        %v1633 = vsel %vm321, %v1604, 0
        %v1636 = vsel %vm321, %v1605, 0
        %v1639 = vsel %vm321, %v1606, 0
        %v1642 = vsel %vm321, %v1607, 0
        %v1645 = vsel %vm321, %v1608, 0
        %v1648 = vsel %vm321, %v1609, 0
        %v1651 = vsel %vm321, %v1610, 0
        %v1654 = vsel %vm321, %v1611, 0
        %v1657 = vsel %vm321, %v1612, 0
        %v1660 = vsel %vm321, %v1613, 0
        %1662 = vmatprep.subr.bf16.mxu0 0
        %1663 = vmatpush1.bf16.msra.mxu0 %v205
        %1664 = vmatprep.subr.bf16.mxu0 0
        %1665 = vmatpush1.bf16.msra.mxu0 %v206
        %1666 = vmatprep.subr.bf16.mxu0 0
        %1667 = vmatpush1.bf16.msra.mxu0 %v207
        %1668 = vmatprep.subr.bf16.mxu0 0
        %1669 = vmatpush1.bf16.msra.mxu0 %v208
        %1670 = vmatprep.subr.bf16.mxu0 0
        %1671 = vmatpush1.bf16.msra.mxu0 0
        %1672 = vmatprep.subr.bf16.mxu0 0
        %1673 = vmatpush1.bf16.msra.mxu0 0
        %1674 = vmatprep.subr.bf16.mxu0 0
        %1675 = vmatpush1.bf16.msra.mxu0 0
        %1676 = vmatprep.subr.bf16.mxu0 0
        %1677 = vmatpush1.bf16.msra.mxu0 0
        %1678 = vmatprep.subr.bf16.mxu0 0
        %1679 = vmatpush1.bf16.msra.mxu0 0
        %1680 = vmatprep.subr.bf16.mxu0 0
        %1681 = vmatpush1.bf16.msra.mxu0 0
        %1682 = vmatprep.subr.bf16.mxu0 0
        %1683 = vmatpush1.bf16.msra.mxu0 0
        %1684 = vmatprep.subr.bf16.mxu0 0
        %1685 = vmatpush1.bf16.msra.mxu0 0
        %1686 = vmatprep.subr.bf16.mxu0 0
        %1687 = vmatpush1.bf16.msra.mxu0 0
        %1688 = vmatprep.subr.bf16.mxu0 0
        %1689 = vmatpush1.bf16.msra.mxu0 0
        %1690 = vmatprep.subr.bf16.mxu0 0
        %1691 = vmatpush1.bf16.msra.mxu0 0
        %1692 = vmatprep.subr.bf16.mxu0 0
        %1693 = vmatpush1.bf16.msra.mxu0 0
        %1694 = vmatprep.mubr.bf16.mxu0 0
        %1695 = vmatmul.mubr.bf16.gmra.mrb[0].mxu0 %v1615
        %v1696 = vpop.f32.mrb[0].mxu0
        %v1697 = vadd.f32 0.0, %v1696
        %v1698 = vpop.f32.mrb[0].mxu0
        %v1699 = vpop.f32.mrb[0].mxu0
        %v1700 = vadd.f32 0.0, %v1699
        %v1701 = vpop.f32.mrb[0].mxu0
        %1702 = vmatprep.mubr.bf16.mxu0 0
        %1703 = vmatmul.mubr.bf16.gmra.mrb[0].mxu0 %v1618
        %v1704 = vpop.f32.mrb[0].mxu0
        %v1705 = vadd.f32 0.0, %v1704
        %v1706 = vpop.f32.mrb[0].mxu0
        %v1707 = vpop.f32.mrb[0].mxu0
        %v1708 = vadd.f32 0.0, %v1707
        %v1709 = vpop.f32.mrb[0].mxu0
        %1710 = vmatprep.mubr.bf16.mxu0 0
        %1711 = vmatmul.mubr.bf16.gmra.mrb[0].mxu0 %v1621
        %v1712 = vpop.f32.mrb[0].mxu0
        %v1713 = vadd.f32 0.0, %v1712
        %v1714 = vpop.f32.mrb[0].mxu0
        %v1715 = vpop.f32.mrb[0].mxu0
        %v1716 = vadd.f32 0.0, %v1715
        %v1717 = vpop.f32.mrb[0].mxu0
        %1718 = vmatprep.mubr.bf16.mxu0 0
        %1719 = vmatmul.mubr.bf16.gmra.mrb[0].mxu0 %v1624
        %v1720 = vpop.f32.mrb[0].mxu0
        %v1721 = vadd.f32 0.0, %v1720
        %v1722 = vpop.f32.mrb[0].mxu0
        %v1723 = vpop.f32.mrb[0].mxu0
        %v1724 = vadd.f32 0.0, %v1723
        %v1725 = vpop.f32.mrb[0].mxu0
        %1726 = vmatprep.mubr.bf16.mxu0 0
        %1727 = vmatmul.mubr.bf16.gmra.mrb[0].mxu0 %v1627
        %v1728 = vpop.f32.mrb[0].mxu0
        %v1729 = vadd.f32 0.0, %v1728
        %v1730 = vpop.f32.mrb[0].mxu0
        %v1731 = vpop.f32.mrb[0].mxu0
        %v1732 = vadd.f32 0.0, %v1731
        %v1733 = vpop.f32.mrb[0].mxu0
        %1734 = vmatprep.mubr.bf16.mxu0 0
        %1735 = vmatmul.mubr.bf16.gmra.mrb[0].mxu0 %v1630
        %v1736 = vpop.f32.mrb[0].mxu0
        %v1737 = vadd.f32 0.0, %v1736
        %v1738 = vpop.f32.mrb[0].mxu0
        %v1739 = vpop.f32.mrb[0].mxu0
        %v1740 = vadd.f32 0.0, %v1739
        %v1741 = vpop.f32.mrb[0].mxu0
        %1742 = vmatprep.mubr.bf16.mxu0 0
        %1743 = vmatmul.mubr.bf16.gmra.mrb[0].mxu0 %v1633
        %v1744 = vpop.f32.mrb[0].mxu0
        %v1745 = vadd.f32 0.0, %v1744
        %v1746 = vpop.f32.mrb[0].mxu0
        %v1747 = vpop.f32.mrb[0].mxu0
        %v1748 = vadd.f32 0.0, %v1747
        %v1749 = vpop.f32.mrb[0].mxu0
        %1750 = vmatprep.mubr.bf16.mxu0 0
        %1751 = vmatmul.mubr.bf16.gmra.mrb[0].mxu0 %v1636
        %v1752 = vpop.f32.mrb[0].mxu0
        %v1753 = vadd.f32 0.0, %v1752
        %v1754 = vpop.f32.mrb[0].mxu0
        %v1755 = vpop.f32.mrb[0].mxu0
        %v1756 = vadd.f32 0.0, %v1755
        %v1757 = vpop.f32.mrb[0].mxu0
        %1758 = vmatprep.mubr.bf16.mxu0 0
        %1759 = vmatmul.mubr.bf16.gmra.mrb[0].mxu0 %v1639
        %v1760 = vpop.f32.mrb[0].mxu0
        %v1761 = vadd.f32 0.0, %v1760
        %v1762 = vpop.f32.mrb[0].mxu0
        %v1763 = vpop.f32.mrb[0].mxu0
        %v1764 = vadd.f32 0.0, %v1763
        %v1765 = vpop.f32.mrb[0].mxu0
        %1766 = vmatprep.mubr.bf16.mxu0 0
        %1767 = vmatmul.mubr.bf16.gmra.mrb[0].mxu0 %v1642
        %v1768 = vpop.f32.mrb[0].mxu0
        %v1769 = vadd.f32 0.0, %v1768
        %v1770 = vpop.f32.mrb[0].mxu0
        %v1771 = vpop.f32.mrb[0].mxu0
        %v1772 = vadd.f32 0.0, %v1771
        %v1773 = vpop.f32.mrb[0].mxu0
        %1774 = vmatprep.mubr.bf16.mxu0 0
        %1775 = vmatmul.mubr.bf16.gmra.mrb[0].mxu0 %v1645
        %v1776 = vpop.f32.mrb[0].mxu0
        %v1777 = vadd.f32 0.0, %v1776
        %v1778 = vpop.f32.mrb[0].mxu0
        %v1779 = vpop.f32.mrb[0].mxu0
        %v1780 = vadd.f32 0.0, %v1779
        %v1781 = vpop.f32.mrb[0].mxu0
        %1782 = vmatprep.mubr.bf16.mxu0 0
        %1783 = vmatmul.mubr.bf16.gmra.mrb[0].mxu0 %v1648
        %v1784 = vpop.f32.mrb[0].mxu0
        %v1785 = vadd.f32 0.0, %v1784
        %v1786 = vpop.f32.mrb[0].mxu0
        %v1787 = vpop.f32.mrb[0].mxu0
        %v1788 = vadd.f32 0.0, %v1787
        %v1789 = vpop.f32.mrb[0].mxu0
        %1790 = vmatprep.mubr.bf16.mxu0 0
        %1791 = vmatmul.mubr.bf16.gmra.mrb[0].mxu0 %v1651
        %v1792 = vpop.f32.mrb[0].mxu0
        %v1793 = vadd.f32 0.0, %v1792
        %v1794 = vpop.f32.mrb[0].mxu0
        %v1795 = vpop.f32.mrb[0].mxu0
        %v1796 = vadd.f32 0.0, %v1795
        %v1797 = vpop.f32.mrb[0].mxu0
        %1798 = vmatprep.mubr.bf16.mxu0 0
        %1799 = vmatmul.mubr.bf16.gmra.mrb[0].mxu0 %v1654
        %v1800 = vpop.f32.mrb[0].mxu0
        %v1801 = vadd.f32 0.0, %v1800
        %v1802 = vpop.f32.mrb[0].mxu0
        %v1803 = vpop.f32.mrb[0].mxu0
        %v1804 = vadd.f32 0.0, %v1803
        %v1805 = vpop.f32.mrb[0].mxu0
        %1806 = vmatprep.mubr.bf16.mxu0 0
        %1807 = vmatmul.mubr.bf16.gmra.mrb[0].mxu0 %v1657
        %v1808 = vpop.f32.mrb[0].mxu0
        %v1809 = vadd.f32 0.0, %v1808
        %v1810 = vpop.f32.mrb[0].mxu0
        %v1811 = vpop.f32.mrb[0].mxu0
        %v1812 = vadd.f32 0.0, %v1811
        %v1813 = vpop.f32.mrb[0].mxu0
        %1814 = vmatprep.mubr.bf16.mxu0 0
        %1815 = vmatmul.mubr.bf16.gmra.mrb[0].mxu0 %v1660
        %v1816 = vpop.f32.mrb[0].mxu0
        %v1817 = vadd.f32 0.0, %v1816
        %v1818 = vpop.f32.mrb[0].mxu0
        %v1819 = vpop.f32.mrb[0].mxu0
        %v1820 = vadd.f32 0.0, %v1819
        %v1821 = vpop.f32.mrb[0].mxu0
        %1822 = vdwg.mxu0
        %s1823 = scalar_lea.vmem %s2, 32
        %v1824 = vld [vmem:[%s1823] sm:$0xff]
        %v1825 = vld [vmem:[%s1823 + $0x8] sm:$0xff]
        %v1827 = vsel %vm858, %v1697, 0
        %v1830 = vsel %vm858, %v1700, 0
        %v1833 = vsel %vm858, %v1705, 0
        %v1836 = vsel %vm858, %v1708, 0
        %v1839 = vsel %vm858, %v1713, 0
        %v1842 = vsel %vm858, %v1716, 0
        %v1845 = vsel %vm858, %v1721, 0
        %v1848 = vsel %vm858, %v1724, 0
        %v1851 = vsel %vm858, %v1729, 0
        %v1854 = vsel %vm858, %v1732, 0
        %v1857 = vsel %vm858, %v1737, 0
        %v1860 = vsel %vm858, %v1740, 0
        %v1863 = vsel %vm858, %v1745, 0
        %v1866 = vsel %vm858, %v1748, 0
        %v1869 = vsel %vm858, %v1753, 0
        %v1872 = vsel %vm858, %v1756, 0
        %v1875 = vsel %vm858, %v1761, 0
        %v1878 = vsel %vm858, %v1764, 0
        %v1881 = vsel %vm858, %v1769, 0
        %v1884 = vsel %vm858, %v1772, 0
        %v1887 = vsel %vm858, %v1777, 0
        %v1890 = vsel %vm858, %v1780, 0
        %v1893 = vsel %vm858, %v1785, 0
        %v1896 = vsel %vm858, %v1788, 0
        %v1899 = vsel %vm858, %v1793, 0
        %v1902 = vsel %vm858, %v1796, 0
        %v1905 = vsel %vm858, %v1801, 0
        %v1908 = vsel %vm858, %v1804, 0
        %v1911 = vsel %vm858, %v1809, 0
        %v1914 = vsel %vm858, %v1812, 0
        %v1917 = vsel %vm858, %v1817, 0
        %v1920 = vsel %vm858, %v1820, 0
        %1922 = vmatprep.subr.mxu0 0.0
        %1923 = vmatpush1.msra.mxu0 %v1824
        %1924 = vmatprep.subr.mxu0 0.0
        %1925 = vmatpush1.msra.mxu0 %v1825
        %1926 = vmatprep.subr.mxu0 0.0
        %1927 = vmatpush1.msra.mxu0 0.0
        %1928 = vmatprep.subr.mxu0 0.0
        %1929 = vmatpush1.msra.mxu0 0.0
        %1930 = vmatprep.subr.mxu0 0.0
        %1931 = vmatpush1.msra.mxu0 0.0
        %1932 = vmatprep.subr.mxu0 0.0
        %1933 = vmatpush1.msra.mxu0 0.0
        %1934 = vmatprep.subr.mxu0 0.0
        %1935 = vmatpush1.msra.mxu0 0.0
        %1936 = vmatprep.subr.mxu0 0.0
        %1937 = vmatpush1.msra.mxu0 0.0
        %1938 = vmatprep.subr.mxu0 0.0
        %1939 = vmatpush1.msra.mxu0 0.0
        %1940 = vmatprep.subr.mxu0 0.0
        %1941 = vmatpush1.msra.mxu0 0.0
        %1942 = vmatprep.subr.mxu0 0.0
        %1943 = vmatpush1.msra.mxu0 0.0
        %1944 = vmatprep.subr.mxu0 0.0
        %1945 = vmatpush1.msra.mxu0 0.0
        %1946 = vmatprep.subr.mxu0 0.0
        %1947 = vmatpush1.msra.mxu0 0.0
        %1948 = vmatprep.subr.mxu0 0.0
        %1949 = vmatpush1.msra.mxu0 0.0
        %1950 = vmatprep.subr.mxu0 0.0
        %1951 = vmatpush1.msra.mxu0 0.0
        %1952 = vmatprep.subr.mxu0 0.0
        %1953 = vmatpush1.msra.mxu0 0.0
        %1954 = vmatprep.subr.mxu0 0.0
        %1955 = vmatpush1.msra.mxu0 0.0
        %1956 = vmatprep.subr.mxu0 0.0
        %1957 = vmatpush1.msra.mxu0 0.0
        %1958 = vmatprep.subr.mxu0 0.0
        %1959 = vmatpush1.msra.mxu0 0.0
        %1960 = vmatprep.subr.mxu0 0.0
        %1961 = vmatpush1.msra.mxu0 0.0
        %1962 = vmatprep.subr.mxu0 0.0
        %1963 = vmatpush1.msra.mxu0 0.0
        %1964 = vmatprep.subr.mxu0 0.0
        %1965 = vmatpush1.msra.mxu0 0.0
        %1966 = vmatprep.subr.mxu0 0.0
        %1967 = vmatpush1.msra.mxu0 0.0
        %1968 = vmatprep.subr.mxu0 0.0
        %1969 = vmatpush1.msra.mxu0 0.0
        %1970 = vmatprep.subr.mxu0 0.0
        %1971 = vmatpush1.msra.mxu0 0.0
        %1972 = vmatprep.subr.mxu0 0.0
        %1973 = vmatpush1.msra.mxu0 0.0
        %1974 = vmatprep.subr.mxu0 0.0
        %1975 = vmatpush1.msra.mxu0 0.0
        %1976 = vmatprep.subr.mxu0 0.0
        %1977 = vmatpush1.msra.mxu0 0.0
        %1978 = vmatprep.subr.mxu0 0.0
        %1979 = vmatpush1.msra.mxu0 0.0
        %1980 = vmatprep.subr.mxu0 0.0
        %1981 = vmatpush1.msra.mxu0 0.0
        %1982 = vmatprep.subr.mxu0 0.0
        %1983 = vmatpush1.msra.mxu0 0.0
        %1984 = vmatprep.subr.mxu0 0.0
        %1985 = vmatpush1.msra.mxu0 0.0
        %1986 = vmatprep.mubr.f32.mxu0 0.0
        %1987 = vmatmul.mubr.f32.gmra.mrb[0].mxu0 %v1827
        %v1988 = vpop.f32.mrb[0].mxu0
        %v1989 = vadd.f32 0.0, %v1988
        %v1990 = vpop.f32.mrb[0].mxu0
        %1991 = vmatprep.mubr.f32.mxu0 0.0
        %1992 = vmatmul.mubr.f32.gmra.mrb[0].mxu0 %v1830
        %v1993 = vpop.f32.mrb[0].mxu0
        %v1994 = vadd.f32 0.0, %v1993
        %v1995 = vpop.f32.mrb[0].mxu0
        %1996 = vmatprep.mubr.f32.mxu0 0.0
        %1997 = vmatmul.mubr.f32.gmra.mrb[0].mxu0 %v1833
        %v1998 = vpop.f32.mrb[0].mxu0
        %v1999 = vadd.f32 0.0, %v1998
        %v2000 = vpop.f32.mrb[0].mxu0
        %2001 = vmatprep.mubr.f32.mxu0 0.0
        %2002 = vmatmul.mubr.f32.gmra.mrb[0].mxu0 %v1836
        %v2003 = vpop.f32.mrb[0].mxu0
        %v2004 = vadd.f32 0.0, %v2003
        %v2005 = vpop.f32.mrb[0].mxu0
        %2006 = vmatprep.mubr.f32.mxu0 0.0
        %2007 = vmatmul.mubr.f32.gmra.mrb[0].mxu0 %v1839
        %v2008 = vpop.f32.mrb[0].mxu0
        %v2009 = vadd.f32 0.0, %v2008
        %v2010 = vpop.f32.mrb[0].mxu0
        %2011 = vmatprep.mubr.f32.mxu0 0.0
        %2012 = vmatmul.mubr.f32.gmra.mrb[0].mxu0 %v1842
        %v2013 = vpop.f32.mrb[0].mxu0
        %v2014 = vadd.f32 0.0, %v2013
        %v2015 = vpop.f32.mrb[0].mxu0
        %2016 = vmatprep.mubr.f32.mxu0 0.0
        %2017 = vmatmul.mubr.f32.gmra.mrb[0].mxu0 %v1845
        %v2018 = vpop.f32.mrb[0].mxu0
        %v2019 = vadd.f32 0.0, %v2018
        %v2020 = vpop.f32.mrb[0].mxu0
        %2021 = vmatprep.mubr.f32.mxu0 0.0
        %2022 = vmatmul.mubr.f32.gmra.mrb[0].mxu0 %v1848
        %v2023 = vpop.f32.mrb[0].mxu0
        %v2024 = vadd.f32 0.0, %v2023
        %v2025 = vpop.f32.mrb[0].mxu0
        %2026 = vmatprep.mubr.f32.mxu0 0.0
        %2027 = vmatmul.mubr.f32.gmra.mrb[0].mxu0 %v1851
        %v2028 = vpop.f32.mrb[0].mxu0
        %v2029 = vadd.f32 0.0, %v2028
        %v2030 = vpop.f32.mrb[0].mxu0
        %2031 = vmatprep.mubr.f32.mxu0 0.0
        %2032 = vmatmul.mubr.f32.gmra.mrb[0].mxu0 %v1854
        %v2033 = vpop.f32.mrb[0].mxu0
        %v2034 = vadd.f32 0.0, %v2033
        %v2035 = vpop.f32.mrb[0].mxu0
        %2036 = vmatprep.mubr.f32.mxu0 0.0
        %2037 = vmatmul.mubr.f32.gmra.mrb[0].mxu0 %v1857
        %v2038 = vpop.f32.mrb[0].mxu0
        %v2039 = vadd.f32 0.0, %v2038
        %v2040 = vpop.f32.mrb[0].mxu0
        %2041 = vmatprep.mubr.f32.mxu0 0.0
        %2042 = vmatmul.mubr.f32.gmra.mrb[0].mxu0 %v1860
        %v2043 = vpop.f32.mrb[0].mxu0
        %v2044 = vadd.f32 0.0, %v2043
        %v2045 = vpop.f32.mrb[0].mxu0
        %2046 = vmatprep.mubr.f32.mxu0 0.0
        %2047 = vmatmul.mubr.f32.gmra.mrb[0].mxu0 %v1863
        %v2048 = vpop.f32.mrb[0].mxu0
        %v2049 = vadd.f32 0.0, %v2048
        %v2050 = vpop.f32.mrb[0].mxu0
        %2051 = vmatprep.mubr.f32.mxu0 0.0
        %2052 = vmatmul.mubr.f32.gmra.mrb[0].mxu0 %v1866
        %v2053 = vpop.f32.mrb[0].mxu0
        %v2054 = vadd.f32 0.0, %v2053
        %v2055 = vpop.f32.mrb[0].mxu0
        %2056 = vmatprep.mubr.f32.mxu0 0.0
        %2057 = vmatmul.mubr.f32.gmra.mrb[0].mxu0 %v1869
        %v2058 = vpop.f32.mrb[0].mxu0
        %v2059 = vadd.f32 0.0, %v2058
        %v2060 = vpop.f32.mrb[0].mxu0
        %2061 = vmatprep.mubr.f32.mxu0 0.0
        %2062 = vmatmul.mubr.f32.gmra.mrb[0].mxu0 %v1872
        %v2063 = vpop.f32.mrb[0].mxu0
        %v2064 = vadd.f32 0.0, %v2063
        %v2065 = vpop.f32.mrb[0].mxu0
        %2066 = vmatprep.mubr.f32.mxu0 0.0
        %2067 = vmatmul.mubr.f32.gmra.mrb[0].mxu0 %v1875
        %v2068 = vpop.f32.mrb[0].mxu0
        %v2069 = vadd.f32 0.0, %v2068
        %v2070 = vpop.f32.mrb[0].mxu0
        %2071 = vmatprep.mubr.f32.mxu0 0.0
        %2072 = vmatmul.mubr.f32.gmra.mrb[0].mxu0 %v1878
        %v2073 = vpop.f32.mrb[0].mxu0
        %v2074 = vadd.f32 0.0, %v2073
        %v2075 = vpop.f32.mrb[0].mxu0
        %2076 = vmatprep.mubr.f32.mxu0 0.0
        %2077 = vmatmul.mubr.f32.gmra.mrb[0].mxu0 %v1881
        %v2078 = vpop.f32.mrb[0].mxu0
        %v2079 = vadd.f32 0.0, %v2078
        %v2080 = vpop.f32.mrb[0].mxu0
        %2081 = vmatprep.mubr.f32.mxu0 0.0
        %2082 = vmatmul.mubr.f32.gmra.mrb[0].mxu0 %v1884
        %v2083 = vpop.f32.mrb[0].mxu0
        %v2084 = vadd.f32 0.0, %v2083
        %v2085 = vpop.f32.mrb[0].mxu0
        %2086 = vmatprep.mubr.f32.mxu0 0.0
        %2087 = vmatmul.mubr.f32.gmra.mrb[0].mxu0 %v1887
        %v2088 = vpop.f32.mrb[0].mxu0
        %v2089 = vadd.f32 0.0, %v2088
        %v2090 = vpop.f32.mrb[0].mxu0
        %2091 = vmatprep.mubr.f32.mxu0 0.0
        %2092 = vmatmul.mubr.f32.gmra.mrb[0].mxu0 %v1890
        %v2093 = vpop.f32.mrb[0].mxu0
        %v2094 = vadd.f32 0.0, %v2093
        %v2095 = vpop.f32.mrb[0].mxu0
        %2096 = vmatprep.mubr.f32.mxu0 0.0
        %2097 = vmatmul.mubr.f32.gmra.mrb[0].mxu0 %v1893
        %v2098 = vpop.f32.mrb[0].mxu0
        %v2099 = vadd.f32 0.0, %v2098
        %v2100 = vpop.f32.mrb[0].mxu0
        %2101 = vmatprep.mubr.f32.mxu0 0.0
        %2102 = vmatmul.mubr.f32.gmra.mrb[0].mxu0 %v1896
        %v2103 = vpop.f32.mrb[0].mxu0
        %v2104 = vadd.f32 0.0, %v2103
        %v2105 = vpop.f32.mrb[0].mxu0
        %2106 = vmatprep.mubr.f32.mxu0 0.0
        %2107 = vmatmul.mubr.f32.gmra.mrb[0].mxu0 %v1899
        %v2108 = vpop.f32.mrb[0].mxu0
        %v2109 = vadd.f32 0.0, %v2108
        %v2110 = vpop.f32.mrb[0].mxu0
        %2111 = vmatprep.mubr.f32.mxu0 0.0
        %2112 = vmatmul.mubr.f32.gmra.mrb[0].mxu0 %v1902
        %v2113 = vpop.f32.mrb[0].mxu0
        %v2114 = vadd.f32 0.0, %v2113
        %v2115 = vpop.f32.mrb[0].mxu0
        %2116 = vmatprep.mubr.f32.mxu0 0.0
        %2117 = vmatmul.mubr.f32.gmra.mrb[0].mxu0 %v1905
        %v2118 = vpop.f32.mrb[0].mxu0
        %v2119 = vadd.f32 0.0, %v2118
        %v2120 = vpop.f32.mrb[0].mxu0
        %2121 = vmatprep.mubr.f32.mxu0 0.0
        %2122 = vmatmul.mubr.f32.gmra.mrb[0].mxu0 %v1908
        %v2123 = vpop.f32.mrb[0].mxu0
        %v2124 = vadd.f32 0.0, %v2123
        %v2125 = vpop.f32.mrb[0].mxu0
        %2126 = vmatprep.mubr.f32.mxu0 0.0
        %2127 = vmatmul.mubr.f32.gmra.mrb[0].mxu0 %v1911
        %v2128 = vpop.f32.mrb[0].mxu0
        %v2129 = vadd.f32 0.0, %v2128
        %v2130 = vpop.f32.mrb[0].mxu0
        %2131 = vmatprep.mubr.f32.mxu0 0.0
        %2132 = vmatmul.mubr.f32.gmra.mrb[0].mxu0 %v1914
        %v2133 = vpop.f32.mrb[0].mxu0
        %v2134 = vadd.f32 0.0, %v2133
        %v2135 = vpop.f32.mrb[0].mxu0
        %2136 = vmatprep.mubr.f32.mxu0 0.0
        %2137 = vmatmul.mubr.f32.gmra.mrb[0].mxu0 %v1917
        %v2138 = vpop.f32.mrb[0].mxu0
        %v2139 = vadd.f32 0.0, %v2138
        %v2140 = vpop.f32.mrb[0].mxu0
        %2141 = vmatprep.mubr.f32.mxu0 0.0
        %2142 = vmatmul.mubr.f32.gmra.mrb[0].mxu0 %v1920
        %v2143 = vpop.f32.mrb[0].mxu0
        %v2144 = vadd.f32 0.0, %v2143
        %v2145 = vpop.f32.mrb[0].mxu0
        %2146 = vdwg.mxu0
        %v2147 = vadd.f32 %v1343, %v1989
        %v2148 = vadd.f32 %v1348, %v1994
        %v2149 = vadd.f32 %v1353, %v1999
        %v2150 = vadd.f32 %v1358, %v2004
        %v2151 = vadd.f32 %v1363, %v2009
        %v2152 = vadd.f32 %v1368, %v2014
        %v2153 = vadd.f32 %v1373, %v2019
        %v2154 = vadd.f32 %v1378, %v2024
        %v2155 = vadd.f32 %v1383, %v2029
        %v2156 = vadd.f32 %v1388, %v2034
        %v2157 = vadd.f32 %v1393, %v2039
        %v2158 = vadd.f32 %v1398, %v2044
        %v2159 = vadd.f32 %v1403, %v2049
        %v2160 = vadd.f32 %v1408, %v2054
        %v2161 = vadd.f32 %v1413, %v2059
        %v2162 = vadd.f32 %v1418, %v2064
        %v2163 = vadd.f32 %v1423, %v2069
        %v2164 = vadd.f32 %v1428, %v2074
        %v2165 = vadd.f32 %v1433, %v2079
        %v2166 = vadd.f32 %v1438, %v2084
        %v2167 = vadd.f32 %v1443, %v2089
        %v2168 = vadd.f32 %v1448, %v2094
        %v2169 = vadd.f32 %v1453, %v2099
        %v2170 = vadd.f32 %v1458, %v2104
        %v2171 = vadd.f32 %v1463, %v2109
        %v2172 = vadd.f32 %v1468, %v2114
        %v2173 = vadd.f32 %v1473, %v2119
        %v2174 = vadd.f32 %v1478, %v2124
        %v2175 = vadd.f32 %v1483, %v2129
        %v2176 = vadd.f32 %v1488, %v2134
        %v2177 = vadd.f32 %v1493, %v2139
        %v2178 = vadd.f32 %v1498, %v2144
        %v2179 = vld [vmem:[%s3] sm:$0xff]
        %v2180 = vld [vmem:[%s3 + $0x8] sm:$0xff]
        %v2181 = vld [vmem:[%s3 + $0x10] sm:$0xff]
        %v2182 = vld [vmem:[%s3 + $0x18] sm:$0xff]
        %v2183 = vld [vmem:[%s3 + $0x20] sm:$0xff]
        %v2184 = vld [vmem:[%s3 + $0x28] sm:$0xff]
        %v2185 = vld [vmem:[%s3 + $0x30] sm:$0xff]
        %v2186 = vld [vmem:[%s3 + $0x38] sm:$0xff]
        %v2187 = vld [vmem:[%s3 + $0x40] sm:$0xff]
        %v2188 = vld [vmem:[%s3 + $0x48] sm:$0xff]
        %v2189 = vld [vmem:[%s3 + $0x50] sm:$0xff]
        %v2190 = vld [vmem:[%s3 + $0x58] sm:$0xff]
        %v2191 = vld [vmem:[%s3 + $0x60] sm:$0xff]
        %v2192 = vld [vmem:[%s3 + $0x68] sm:$0xff]
        %v2193 = vld [vmem:[%s3 + $0x70] sm:$0xff]
        %v2194 = vld [vmem:[%s3 + $0x78] sm:$0xff]
        %v2195 = vld [vmem:[%s3 + $0x80] sm:$0xff]
        %v2196 = vld [vmem:[%s3 + $0x88] sm:$0xff]
        %v2197 = vld [vmem:[%s3 + $0x90] sm:$0xff]
        %v2198 = vld [vmem:[%s3 + $0x98] sm:$0xff]
        %v2199 = vld [vmem:[%s3 + $0xa0] sm:$0xff]
        %v2200 = vld [vmem:[%s3 + $0xa8] sm:$0xff]
        %v2201 = vld [vmem:[%s3 + $0xb0] sm:$0xff]
        %v2202 = vld [vmem:[%s3 + $0xb8] sm:$0xff]
        %v2203 = vld [vmem:[%s3 + $0xc0] sm:$0xff]
        %v2204 = vld [vmem:[%s3 + $0xc8] sm:$0xff]
        %v2205 = vld [vmem:[%s3 + $0xd0] sm:$0xff]
        %v2206 = vld [vmem:[%s3 + $0xd8] sm:$0xff]
        %v2207 = vld [vmem:[%s3 + $0xe0] sm:$0xff]
        %v2208 = vld [vmem:[%s3 + $0xe8] sm:$0xff]
        %v2209 = vld [vmem:[%s3 + $0xf0] sm:$0xff]
        %v2210 = vld [vmem:[%s3 + $0xf8] sm:$0xff]
        %2212 = vset.pattern.permute.xlu0 0
        %2213 = vperm.xlu0 %2212, %v2179
        %v2214 = vpop.permute.xlu0 %2213
        %2217 = vset.pattern.permute.xlu0 0
        %2218 = vperm.xlu0 %2217, %v2180
        %v2219 = vpop.permute.xlu0 %2218
        %2222 = vset.pattern.permute.xlu0 0
        %2223 = vperm.xlu0 %2222, %v2181
        %v2224 = vpop.permute.xlu0 %2223
        %2227 = vset.pattern.permute.xlu0 0
        %2228 = vperm.xlu0 %2227, %v2182
        %v2229 = vpop.permute.xlu0 %2228
        %2232 = vset.pattern.permute.xlu0 0
        %2233 = vperm.xlu0 %2232, %v2183
        %v2234 = vpop.permute.xlu0 %2233
        %2237 = vset.pattern.permute.xlu0 0
        %2238 = vperm.xlu0 %2237, %v2184
        %v2239 = vpop.permute.xlu0 %2238
        %2242 = vset.pattern.permute.xlu0 0
        %2243 = vperm.xlu0 %2242, %v2185
        %v2244 = vpop.permute.xlu0 %2243
        %2247 = vset.pattern.permute.xlu0 0
        %2248 = vperm.xlu0 %2247, %v2186
        %v2249 = vpop.permute.xlu0 %2248
        %2252 = vset.pattern.permute.xlu0 0
        %2253 = vperm.xlu0 %2252, %v2187
        %v2254 = vpop.permute.xlu0 %2253
        %2257 = vset.pattern.permute.xlu0 0
        %2258 = vperm.xlu0 %2257, %v2188
        %v2259 = vpop.permute.xlu0 %2258
        %2262 = vset.pattern.permute.xlu0 0
        %2263 = vperm.xlu0 %2262, %v2189
        %v2264 = vpop.permute.xlu0 %2263
        %2267 = vset.pattern.permute.xlu0 0
        %2268 = vperm.xlu0 %2267, %v2190
        %v2269 = vpop.permute.xlu0 %2268
        %2272 = vset.pattern.permute.xlu0 0
        %2273 = vperm.xlu0 %2272, %v2191
        %v2274 = vpop.permute.xlu0 %2273
        %2277 = vset.pattern.permute.xlu0 0
        %2278 = vperm.xlu0 %2277, %v2192
        %v2279 = vpop.permute.xlu0 %2278
        %2282 = vset.pattern.permute.xlu0 0
        %2283 = vperm.xlu0 %2282, %v2193
        %v2284 = vpop.permute.xlu0 %2283
        %2287 = vset.pattern.permute.xlu0 0
        %2288 = vperm.xlu0 %2287, %v2194
        %v2289 = vpop.permute.xlu0 %2288
        %2292 = vset.pattern.permute.xlu0 0
        %2293 = vperm.xlu0 %2292, %v2195
        %v2294 = vpop.permute.xlu0 %2293
        %2297 = vset.pattern.permute.xlu0 0
        %2298 = vperm.xlu0 %2297, %v2196
        %v2299 = vpop.permute.xlu0 %2298
        %2302 = vset.pattern.permute.xlu0 0
        %2303 = vperm.xlu0 %2302, %v2197
        %v2304 = vpop.permute.xlu0 %2303
        %2307 = vset.pattern.permute.xlu0 0
        %2308 = vperm.xlu0 %2307, %v2198
        %v2309 = vpop.permute.xlu0 %2308
        %2312 = vset.pattern.permute.xlu0 0
        %2313 = vperm.xlu0 %2312, %v2199
        %v2314 = vpop.permute.xlu0 %2313
        %2317 = vset.pattern.permute.xlu0 0
        %2318 = vperm.xlu0 %2317, %v2200
        %v2319 = vpop.permute.xlu0 %2318
        %2322 = vset.pattern.permute.xlu0 0
        %2323 = vperm.xlu0 %2322, %v2201
        %v2324 = vpop.permute.xlu0 %2323
        %2327 = vset.pattern.permute.xlu0 0
        %2328 = vperm.xlu0 %2327, %v2202
        %v2329 = vpop.permute.xlu0 %2328
        %2332 = vset.pattern.permute.xlu0 0
        %2333 = vperm.xlu0 %2332, %v2203
        %v2334 = vpop.permute.xlu0 %2333
        %2337 = vset.pattern.permute.xlu0 0
        %2338 = vperm.xlu0 %2337, %v2204
        %v2339 = vpop.permute.xlu0 %2338
        %2342 = vset.pattern.permute.xlu0 0
        %2343 = vperm.xlu0 %2342, %v2205
        %v2344 = vpop.permute.xlu0 %2343
        %2347 = vset.pattern.permute.xlu0 0
        %2348 = vperm.xlu0 %2347, %v2206
        %v2349 = vpop.permute.xlu0 %2348
        %2352 = vset.pattern.permute.xlu0 0
        %2353 = vperm.xlu0 %2352, %v2207
        %v2354 = vpop.permute.xlu0 %2353
        %2357 = vset.pattern.permute.xlu0 0
        %2358 = vperm.xlu0 %2357, %v2208
        %v2359 = vpop.permute.xlu0 %2358
        %2362 = vset.pattern.permute.xlu0 0
        %2363 = vperm.xlu0 %2362, %v2209
        %v2364 = vpop.permute.xlu0 %2363
        %2367 = vset.pattern.permute.xlu0 0
        %2368 = vperm.xlu0 %2367, %v2210
        %v2369 = vpop.permute.xlu0 %2368
        %v2371 = vadd.f32 %v2147, %v2214
        %v2372 = vadd.f32 %v2148, %v2219
        %v2373 = vadd.f32 %v2149, %v2224
        %v2374 = vadd.f32 %v2150, %v2229
        %v2375 = vadd.f32 %v2151, %v2234
        %v2376 = vadd.f32 %v2152, %v2239
        %v2377 = vadd.f32 %v2153, %v2244
        %v2378 = vadd.f32 %v2154, %v2249
        %v2379 = vadd.f32 %v2155, %v2254
        %v2380 = vadd.f32 %v2156, %v2259
        %v2381 = vadd.f32 %v2157, %v2264
        %v2382 = vadd.f32 %v2158, %v2269
        %v2383 = vadd.f32 %v2159, %v2274
        %v2384 = vadd.f32 %v2160, %v2279
        %v2385 = vadd.f32 %v2161, %v2284
        %v2386 = vadd.f32 %v2162, %v2289
        %v2387 = vadd.f32 %v2163, %v2294
        %v2388 = vadd.f32 %v2164, %v2299
        %v2389 = vadd.f32 %v2165, %v2304
        %v2390 = vadd.f32 %v2166, %v2309
        %v2391 = vadd.f32 %v2167, %v2314
        %v2392 = vadd.f32 %v2168, %v2319
        %v2393 = vadd.f32 %v2169, %v2324
        %v2394 = vadd.f32 %v2170, %v2329
        %v2395 = vadd.f32 %v2171, %v2334
        %v2396 = vadd.f32 %v2172, %v2339
        %v2397 = vadd.f32 %v2173, %v2344
        %v2398 = vadd.f32 %v2174, %v2349
        %v2399 = vadd.f32 %v2175, %v2354
        %v2400 = vadd.f32 %v2176, %v2359
        %v2401 = vadd.f32 %v2177, %v2364
        %v2402 = vadd.f32 %v2178, %v2369
        %v2403 = vmax.f32 %v2371, 0.0
        %v2404 = vmax.f32 %v2372, 0.0
        %v2405 = vmax.f32 %v2373, 0.0
        %v2406 = vmax.f32 %v2374, 0.0
        %v2407 = vmax.f32 %v2375, 0.0
        %v2408 = vmax.f32 %v2376, 0.0
        %v2409 = vmax.f32 %v2377, 0.0
        %v2410 = vmax.f32 %v2378, 0.0
        %v2411 = vmax.f32 %v2379, 0.0
        %v2412 = vmax.f32 %v2380, 0.0
        %v2413 = vmax.f32 %v2381, 0.0
        %v2414 = vmax.f32 %v2382, 0.0
        %v2415 = vmax.f32 %v2383, 0.0
        %v2416 = vmax.f32 %v2384, 0.0
        %v2417 = vmax.f32 %v2385, 0.0
        %v2418 = vmax.f32 %v2386, 0.0
        %v2419 = vmax.f32 %v2387, 0.0
        %v2420 = vmax.f32 %v2388, 0.0
        %v2421 = vmax.f32 %v2389, 0.0
        %v2422 = vmax.f32 %v2390, 0.0
        %v2423 = vmax.f32 %v2391, 0.0
        %v2424 = vmax.f32 %v2392, 0.0
        %v2425 = vmax.f32 %v2393, 0.0
        %v2426 = vmax.f32 %v2394, 0.0
        %v2427 = vmax.f32 %v2395, 0.0
        %v2428 = vmax.f32 %v2396, 0.0
        %v2429 = vmax.f32 %v2397, 0.0
        %v2430 = vmax.f32 %v2398, 0.0
        %v2431 = vmax.f32 %v2399, 0.0
        %v2432 = vmax.f32 %v2400, 0.0
        %v2433 = vmax.f32 %v2401, 0.0
        %v2434 = vmax.f32 %v2402, 0.0
        %vm2435 = vcmask 261120
        %2436 = vst.msk [vmem:[%s190] sm:$0xff] %vm2435, %v2403
        %2437 = vst.msk [vmem:[%s190 + $0x8] sm:$0xff] %vm2435, %v2404
        %2438 = vst.msk [vmem:[%s190 + $0x10] sm:$0xff] %vm2435, %v2405
        %2439 = vst.msk [vmem:[%s190 + $0x18] sm:$0xff] %vm2435, %v2406
        %2440 = vst.msk [vmem:[%s190 + $0x20] sm:$0xff] %vm2435, %v2407
        %2441 = vst.msk [vmem:[%s190 + $0x28] sm:$0xff] %vm2435, %v2408
        %2442 = vst.msk [vmem:[%s190 + $0x30] sm:$0xff] %vm2435, %v2409
        %2443 = vst.msk [vmem:[%s190 + $0x38] sm:$0xff] %vm2435, %v2410
        %2444 = vst.msk [vmem:[%s190 + $0x40] sm:$0xff] %vm2435, %v2411
        %2445 = vst.msk [vmem:[%s190 + $0x48] sm:$0xff] %vm2435, %v2412
        %2446 = vst.msk [vmem:[%s190 + $0x50] sm:$0xff] %vm2435, %v2413
        %2447 = vst.msk [vmem:[%s190 + $0x58] sm:$0xff] %vm2435, %v2414
        %2448 = vst.msk [vmem:[%s190 + $0x60] sm:$0xff] %vm2435, %v2415
        %2449 = vst.msk [vmem:[%s190 + $0x68] sm:$0xff] %vm2435, %v2416
        %2450 = vst.msk [vmem:[%s190 + $0x70] sm:$0xff] %vm2435, %v2417
        %2451 = vst.msk [vmem:[%s190 + $0x78] sm:$0xff] %vm2435, %v2418
        %2452 = vst.msk [vmem:[%s190 + $0x80] sm:$0xff] %vm2435, %v2419
        %2453 = vst.msk [vmem:[%s190 + $0x88] sm:$0xff] %vm2435, %v2420
        %2454 = vst.msk [vmem:[%s190 + $0x90] sm:$0xff] %vm2435, %v2421
        %2455 = vst.msk [vmem:[%s190 + $0x98] sm:$0xff] %vm2435, %v2422
        %2456 = vst.msk [vmem:[%s190 + $0xa0] sm:$0xff] %vm2435, %v2423
        %2457 = vst.msk [vmem:[%s190 + $0xa8] sm:$0xff] %vm2435, %v2424
        %2458 = vst.msk [vmem:[%s190 + $0xb0] sm:$0xff] %vm2435, %v2425
        %2459 = vst.msk [vmem:[%s190 + $0xb8] sm:$0xff] %vm2435, %v2426
        %2460 = vst.msk [vmem:[%s190 + $0xc0] sm:$0xff] %vm2435, %v2427
        %2461 = vst.msk [vmem:[%s190 + $0xc8] sm:$0xff] %vm2435, %v2428
        %2462 = vst.msk [vmem:[%s190 + $0xd0] sm:$0xff] %vm2435, %v2429
        %2463 = vst.msk [vmem:[%s190 + $0xd8] sm:$0xff] %vm2435, %v2430
        %2464 = vst.msk [vmem:[%s190 + $0xe0] sm:$0xff] %vm2435, %v2431
        %2465 = vst.msk [vmem:[%s190 + $0xe8] sm:$0xff] %vm2435, %v2432
        %2466 = vst.msk [vmem:[%s190 + $0xf0] sm:$0xff] %vm2435, %v2433
        %2467 = vst.msk [vmem:[%s190 + $0xf8] sm:$0xff] %vm2435, %v2434
        %s2468 = sand.u32 %s115, 1
        %s2469 = scalar_lea.sflag [#allocation3], %s2468
        %s2470 = sand.u32 %s115, 1
        %s2471 = smul.addr %s2470, 256
        %s2472 = scalar_lea.vmem [#allocation2], %s2471
        // Predicated region
        $region37: #{scale_up_forward.1} parent=35 // pred_check
          %p2473 = pneg %p125
        $region38: #{scale_up_forward.1} parent=35 // pred_check_branch
          %2475 = sbr.rel (%p2473) target = $region40
        $region39: #{scale_up_forward.1} parent=35 // pred_region
          %s2477 = ssub.s32 4096, 4096
          %2478 = vsyncadd %s2469, %s2477
          %s2479 = smul.addr %s18, 32
          %s2480 = smul.addr %s2479, 128
          %s2481 = scalar_lea.hbm %s4, %s2480
          %s2482 = sshll.u32 %s2472, 4
          %s2483 = int_to_ptr.vmem [resolvable:$true] %s2482
          %2488 = dma.vmem_to_hbm [thread:$0]  %s2483, 4096, %s2481, %s2469, 128, 128, 8
        $region40: #{scale_up_forward.1} parent=35 // pred_fallthru
          _
      $region36: #{scale_up_forward.1} parent=5 // pred_fallthru
        _
      %p2489 = scmp.le.s32.totalorder 2, %s13
      // Predicated region
      $region41: #{scale_up_forward.1} parent=5 // pred_check
        %p2490 = pneg %p2489
      $region42: #{scale_up_forward.1} parent=5 // pred_check_branch
        %2492 = sbr.rel (%p2490) target = $region44
      $region43: #{scale_up_forward.1} parent=5 // pred_region
        %s2493 = ssub.s32 %s13, 2
        // Predicated region
        $region45: #{scale_up_forward.1} parent=43 // pred_check
          %p2494 = pneg %p131
        $region46: #{scale_up_forward.1} parent=43 // pred_check_branch
          %2496 = sbr.rel (%p2494) target = $region48
        $region47: #{scale_up_forward.1} parent=43 // pred_region
          %s2497 = sand.u32 %s116, 1
          %s2498 = scalar_lea.sflag [#allocation3], %s2497
          %s2499 = sand.u32 %s116, 1
          %s2500 = smul.addr %s2499, 256
          %s2501 = scalar_lea.vmem [#allocation2], %s2500
          %2502 = dma.done %s2498, 4096
        $region48: #{scale_up_forward.1} parent=43 // pred_fallthru
          _
      $region44: #{scale_up_forward.1} parent=5 // pred_fallthru
        _
    $region6: #{scale_up_forward.1} parent=1 // loop_footer
      %s17 = sadd.s32 1, %s13
    $region7: #{scale_up_forward.1} parent=1 // loop_footer_branch
      %12 = sbr.rel target = $region3
    $region8: #{scale_up_forward.1} parent=1 // loop_exit
      _
    %2503 = vsyncpa [#allocation3], 1
    %s2504 = scalar_lea.sflag [#allocation3], 1
    %2505 = vsyncpa %s2504, 1

</llo_original>
